<compile_context>
chip_gen: v6e
topology: v6e:2x2x1
jax: 0.10.0
libtpu: 0.0.40
codegen_flags: <defaults>
</compile_context>

<pallas_src>
import math
import jax
import jax.numpy as jnp
from jax import lax
from jax.experimental import pallas as pl
from jax.experimental.pallas import tpu as pltpu

# ---- small BERT config ----
B = 2          # batch
S = 8          # sequence length
H = 32         # hidden size
NH = 4         # num attention heads
HD = H // NH   # head size
INTER = 64     # intermediate size
EPS = 1e-12    # layer_norm_eps

BS = B * S               # flattened rows for all linears / LayerNorms
WCOLS = 4 * H            # 128 : lane-dense packed-parameter slab width
RB = H + INTER           # 96  : first bias/LayerNorm row in the slab
WROWS = RB + 8           # 104 : 3 bias/LN rows + pad to an 8-sublane multiple

assert NH * HD == H and B * S == BS and INTER + H <= WCOLS and 3 * H + H == WCOLS


def _layernorm(x, gamma, beta):
    # torch.nn.LayerNorm over last dim, biased variance
    mu = jnp.mean(x, axis=-1, keepdims=True)
    var = jnp.mean((x - mu) ** 2, axis=-1, keepdims=True)
    return (x - mu) * lax.rsqrt(var + EPS) * gamma + beta


def bert_layer_kernel(x_ref, w_ref, out_ref):
    x = x_ref[...]                                            # (BS, H)

    # ---- fused QKV projection (1/sqrt(HD) pre-folded into the Q columns) ----
    qkv = jnp.dot(x, w_ref[0:H, 0:3 * H],
                  preferred_element_type=jnp.float32)
    qkv = qkv + w_ref[RB:RB + 1, 0:3 * H]                     # (BS, 3H)
    q = qkv[:, 0:H]
    k = qkv[:, H:2 * H]
    v = qkv[:, 2 * H:3 * H]

    # ---- attention: NH-head loop, batched over B with 3-D einsums ----
    ctx_heads = []
    for h in range(NH):
        c0 = h * HD
        qh = q[:, c0:c0 + HD].reshape(B, S, HD)               # (B, S, HD)
        kh = k[:, c0:c0 + HD].reshape(B, S, HD)
        vh = v[:, c0:c0 + HD].reshape(B, S, HD)
        scores = jnp.einsum('bsd,btd->bst', qh, kh,
                            preferred_element_type=jnp.float32)   # (B, S, S)
        scores = scores - jnp.max(scores, axis=-1, keepdims=True)
        e = jnp.exp(scores)
        probs = e / jnp.sum(e, axis=-1, keepdims=True)
        ctx_heads.append(
            jnp.einsum('bst,btd->bsd', probs, vh,
                       preferred_element_type=jnp.float32).reshape(BS, HD))
    context = jnp.concatenate(ctx_heads, axis=-1)             # (BS, H)

    # ---- BertSelfOutput: dense + residual + LayerNorm ----
    attn = jnp.dot(context, w_ref[0:H, 3 * H:4 * H],
                   preferred_element_type=jnp.float32) + w_ref[RB:RB + 1, 3 * H:4 * H]
    x1 = _layernorm(attn + x,
                    w_ref[RB + 2:RB + 3, 0:H],
                    w_ref[RB + 2:RB + 3, H:2 * H])            # (BS, H)

    # ---- BertIntermediate: dense + ReLU ----
    inter = jnp.dot(x1, w_ref[H:2 * H, 0:INTER],
                    preferred_element_type=jnp.float32) + w_ref[RB + 1:RB + 2, 0:INTER]
    inter = jnp.maximum(inter, 0.0)                           # (BS, INTER)

    # ---- BertOutput: dense + residual + LayerNorm ----
    ffn = jnp.dot(inter, w_ref[H:H + INTER, INTER:INTER + H],
                  preferred_element_type=jnp.float32) + w_ref[RB + 1:RB + 2, INTER:INTER + H]
    out = _layernorm(ffn + x1,
                     w_ref[RB + 2:RB + 3, 2 * H:3 * H],
                     w_ref[RB + 2:RB + 3, 3 * H:4 * H])       # (BS, H)

    out_ref[...] = out.astype(out_ref.dtype)


def pack_params(p):
    """One-time constant transform: fuse QKV, fold 1/sqrt(HD), pack everything
    (weights + biases + LayerNorm params) into one 128-lane-dense slab."""
    inv_sqrt_d = 1.0 / math.sqrt(HD)
    slab = jnp.zeros((WROWS, WCOLS), jnp.float32)
    # weights
    slab = slab.at[0:H, 0:H].set(p["wq"] * inv_sqrt_d)
    slab = slab.at[0:H, H:2 * H].set(p["wk"])
    slab = slab.at[0:H, 2 * H:3 * H].set(p["wv"])
    slab = slab.at[0:H, 3 * H:4 * H].set(p["wo"])
    slab = slab.at[H:2 * H, 0:INTER].set(p["wi"])
    slab = slab.at[H:H + INTER, INTER:INTER + H].set(p["wo2"])
    # biases / LayerNorm params
    slab = slab.at[RB, 0:H].set(p["bq"][0] * inv_sqrt_d)
    slab = slab.at[RB, H:2 * H].set(p["bk"][0])
    slab = slab.at[RB, 2 * H:3 * H].set(p["bv"][0])
    slab = slab.at[RB, 3 * H:4 * H].set(p["bo"][0])
    slab = slab.at[RB + 1, 0:INTER].set(p["bi"][0])
    slab = slab.at[RB + 1, INTER:INTER + H].set(p["bo2"][0])
    slab = slab.at[RB + 2, 0:H].set(p["g1"][0])
    slab = slab.at[RB + 2, H:2 * H].set(p["be1"][0])
    slab = slab.at[RB + 2, 2 * H:3 * H].set(p["g2"][0])
    slab = slab.at[RB + 2, 3 * H:4 * H].set(p["be2"][0])
    return slab


def bert_layer_forward(x, w_slab):
    """x: (B, S, H) float32. w_slab: (WROWS, WCOLS) packed params from pack_params."""
    x2d = x.reshape(BS, H)   # contiguous metadata reshape (free at XLA level)

    out2d = pl.pallas_call(
        bert_layer_kernel,
        out_shape=jax.ShapeDtypeStruct((BS, H), jnp.float32),
        grid_spec=pltpu.PrefetchScalarGridSpec(
            num_scalar_prefetch=0,
            grid=(1,),   # single invocation; whole problem fits comfortably in VMEM
            in_specs=[
                pl.BlockSpec((BS, H), lambda i: (0, 0)),            # hidden states
                pl.BlockSpec((WROWS, WCOLS), lambda i: (0, 0)),     # packed params
            ],
            out_specs=pl.BlockSpec((BS, H), lambda i: (0, 0)),
        ),
        compiler_params=pltpu.CompilerParams(
            dimension_semantics=("arbitrary",)),
    )(x2d, w_slab)

    return out2d.reshape(B, S, H)


def init_params(key):
    ks = jax.random.split(key, 8)
    scale = 0.02
    p = {
        "wq":  scale * jax.random.normal(ks[0], (H, H), jnp.float32),
        "bq":  jnp.full((1, H), 0.01, jnp.float32),
        "wk":  scale * jax.random.normal(ks[1], (H, H), jnp.float32),
        "bk":  jnp.full((1, H), -0.01, jnp.float32),
        "wv":  scale * jax.random.normal(ks[2], (H, H), jnp.float32),
        "bv":  jnp.full((1, H), 0.02, jnp.float32),
        "wo":  scale * jax.random.normal(ks[3], (H, H), jnp.float32),
        "bo":  jnp.full((1, H), 0.0, jnp.float32),
        "g1":  jnp.ones((1, H), jnp.float32),
        "be1": jnp.zeros((1, H), jnp.float32),
        "wi":  scale * jax.random.normal(ks[4], (H, INTER), jnp.float32),
        "bi":  jnp.full((1, INTER), 0.03, jnp.float32),
        "wo2": scale * jax.random.normal(ks[5], (INTER, H), jnp.float32),
        "bo2": jnp.full((1, H), -0.02, jnp.float32),
        "g2":  jnp.ones((1, H), jnp.float32),
        "be2": jnp.zeros((1, H), jnp.float32),
    }
    return p


def reference_forward(x, p):
    """Pure-JAX reference of BertLayer.forward (eval mode, no mask)."""
    def ln(v, g, b):
        mu = jnp.mean(v, axis=-1, keepdims=True)
        var = jnp.mean((v - mu) ** 2, axis=-1, keepdims=True)
        return (v - mu) / jnp.sqrt(var + EPS) * g + b

    q = x @ p["wq"] + p["bq"]
    k = x @ p["wk"] + p["bk"]
    v = x @ p["wv"] + p["bv"]

    def split(t):  # (B,S,H) -> (B,NH,S,HD)
        return t.reshape(B, S, NH, HD).transpose(0, 2, 1, 3)

    qh, kh, vh = split(q), split(k), split(v)
    scores = jnp.einsum("bnsd,bntd->bnst", qh, kh) / math.sqrt(HD)
    probs = jax.nn.softmax(scores, axis=-1)
    ctx = jnp.einsum("bnst,bntd->bnsd", probs, vh)
    ctx = ctx.transpose(0, 2, 1, 3).reshape(B, S, H)
    attn = ctx @ p["wo"] + p["bo"]
    x1 = ln(attn + x, p["g1"], p["be1"])
    inter = jax.nn.relu(x1 @ p["wi"] + p["bi"])
    ffn = inter @ p["wo2"] + p["bo2"]
    return ln(ffn + x1, p["g2"], p["be2"])


if __name__ == "__main__":
    key = jax.random.PRNGKey(0)
    kx, kp = jax.random.split(key)
    x = jax.random.normal(kx, (B, S, H), jnp.float32)
    params = init_params(kp)
    w_slab = pack_params(params)   # one-time constant param transform

    out = bert_layer_forward(x, w_slab)
    out = jax.block_until_ready(out)

    ref = reference_forward(x, params)
    assert out.shape == (B, S, H)
    assert jnp.allclose(out, ref, rtol=2e-4, atol=2e-4), "mismatch vs reference"

    print("KERNEL_OK")
</pallas_src>

<mosaic_0001>
module attributes {stable_mosaic.version = 11 : i64} {
  func.func @bert_layer_kernel(%arg0: i32, %arg1: memref<16x32xf32, #tpu.memory_space<vmem>>, %arg2: memref<104x128xf32, #tpu.memory_space<vmem>>, %arg3: memref<16x32xf32, #tpu.memory_space<vmem>>) attributes {dimension_semantics = [#tpu.dimension_semantics<arbitrary>], iteration_bounds = array<i64: 1>, scalar_prefetch = 0 : i64, scratch_operands = 0 : i64, tpu.core_type = #tpu.core_type<tc>, window_params = [{pipeline_mode = #tpu.pipeline_mode<synchronous>, transform_indices = @transform_0, window_bounds = array<i64: 16, 32>}, {pipeline_mode = #tpu.pipeline_mode<synchronous>, transform_indices = @transform_1, window_bounds = array<i64: 104, 128>}, {pipeline_mode = #tpu.pipeline_mode<synchronous>, transform_indices = @transform_2, window_bounds = array<i64: 16, 32>}]} {
    %c0 = arith.constant 0 : index
    %c0_0 = arith.constant 0 : index
    %0 = vector.load %arg1[%c0, %c0_0] : memref<16x32xf32, #tpu.memory_space<vmem>>, vector<16x32xf32>
    %c0_1 = arith.constant 0 : index
    %c0_2 = arith.constant 0 : index
    %1 = vector.load %arg2[%c0_1, %c0_2] : memref<104x128xf32, #tpu.memory_space<vmem>>, vector<32x96xf32>
    %cst = arith.constant dense<0.000000e+00> : vector<16x96xf32>
    %2 = tpu.matmul %0, %1, %cst {dimension_numbers = #tpu.dot_dimension_numbers<[1], [0], [0], [1], [0, 0, 1, 1], [], []>} : vector<16x32xf32>, vector<32x96xf32>, vector<16x96xf32> -> vector<16x96xf32>
    %c96 = arith.constant 96 : index
    %c0_3 = arith.constant 0 : index
    %3 = vector.load %arg2[%c96, %c0_3] : memref<104x128xf32, #tpu.memory_space<vmem>>, vector<1x96xf32>
    %4 = vector.broadcast %3 : vector<1x96xf32> to vector<16x96xf32>
    %5 = arith.addf %2, %4 : vector<16x96xf32>
    %6 = vector.extract_strided_slice %5 {offsets = [0, 0], sizes = [16, 32], strides = [1, 1]} : vector<16x96xf32> to vector<16x32xf32>
    %7 = vector.extract_strided_slice %5 {offsets = [0, 32], sizes = [16, 32], strides = [1, 1]} : vector<16x96xf32> to vector<16x32xf32>
    %8 = vector.extract_strided_slice %5 {offsets = [0, 64], sizes = [16, 32], strides = [1, 1]} : vector<16x96xf32> to vector<16x32xf32>
    %9 = vector.extract_strided_slice %6 {offsets = [0, 0], sizes = [16, 8], strides = [1, 1]} : vector<16x32xf32> to vector<16x8xf32>
    %10 = vector.shape_cast %9 : vector<16x8xf32> to vector<2x8x8xf32>
    %11 = vector.extract_strided_slice %7 {offsets = [0, 0], sizes = [16, 8], strides = [1, 1]} : vector<16x32xf32> to vector<16x8xf32>
    %12 = vector.shape_cast %11 : vector<16x8xf32> to vector<2x8x8xf32>
    %13 = vector.extract_strided_slice %8 {offsets = [0, 0], sizes = [16, 8], strides = [1, 1]} : vector<16x32xf32> to vector<16x8xf32>
    %14 = vector.shape_cast %13 : vector<16x8xf32> to vector<2x8x8xf32>
    "tpu.trace_start"() <{level = 10 : i32, message = "bsd,btd->bst"}> : () -> ()
    %cst_4 = arith.constant dense<0.000000e+00> : vector<2x8x8xf32>
    %15 = tpu.matmul %10, %12, %cst_4 {dimension_numbers = #tpu.dot_dimension_numbers<[2], [2], [1], [1], [0, 0, 0, 1, 1, 1], [0], [0]>} : vector<2x8x8xf32>, vector<2x8x8xf32>, vector<2x8x8xf32> -> vector<2x8x8xf32>
    "tpu.trace_stop"() : () -> ()
    %cst_5 = arith.constant dense<0xFF800000> : vector<2x8xf32>
    %16 = vector.multi_reduction <maximumf>, %15, %cst_5 [2] : vector<2x8x8xf32> to vector<2x8xf32>
    %17 = vector.shape_cast %16 : vector<2x8xf32> to vector<2x8x1xf32>
    %18 = vector.broadcast %17 : vector<2x8x1xf32> to vector<2x8x8xf32>
    %19 = arith.subf %15, %18 : vector<2x8x8xf32>
    %20 = math.exp %19 : vector<2x8x8xf32>
    %cst_6 = arith.constant dense<0.000000e+00> : vector<2x8xf32>
    %21 = vector.multi_reduction <add>, %20, %cst_6 [2] : vector<2x8x8xf32> to vector<2x8xf32>
    %22 = vector.shape_cast %21 : vector<2x8xf32> to vector<2x8x1xf32>
    %23 = vector.broadcast %22 : vector<2x8x1xf32> to vector<2x8x8xf32>
    %24 = arith.divf %20, %23 : vector<2x8x8xf32>
    "tpu.trace_start"() <{level = 10 : i32, message = "bst,btd->bsd"}> : () -> ()
    %cst_7 = arith.constant dense<0.000000e+00> : vector<2x8x8xf32>
    %25 = tpu.matmul %24, %14, %cst_7 {dimension_numbers = #tpu.dot_dimension_numbers<[2], [1], [1], [2], [0, 0, 0, 1, 1, 2], [0], [0]>} : vector<2x8x8xf32>, vector<2x8x8xf32>, vector<2x8x8xf32> -> vector<2x8x8xf32>
    "tpu.trace_stop"() : () -> ()
    %26 = vector.shape_cast %25 : vector<2x8x8xf32> to vector<16x8xf32>
    %27 = vector.extract_strided_slice %6 {offsets = [0, 8], sizes = [16, 8], strides = [1, 1]} : vector<16x32xf32> to vector<16x8xf32>
    %28 = vector.shape_cast %27 : vector<16x8xf32> to vector<2x8x8xf32>
    %29 = vector.extract_strided_slice %7 {offsets = [0, 8], sizes = [16, 8], strides = [1, 1]} : vector<16x32xf32> to vector<16x8xf32>
    %30 = vector.shape_cast %29 : vector<16x8xf32> to vector<2x8x8xf32>
    %31 = vector.extract_strided_slice %8 {offsets = [0, 8], sizes = [16, 8], strides = [1, 1]} : vector<16x32xf32> to vector<16x8xf32>
    %32 = vector.shape_cast %31 : vector<16x8xf32> to vector<2x8x8xf32>
    "tpu.trace_start"() <{level = 10 : i32, message = "bsd,btd->bst"}> : () -> ()
    %cst_8 = arith.constant dense<0.000000e+00> : vector<2x8x8xf32>
    %33 = tpu.matmul %28, %30, %cst_8 {dimension_numbers = #tpu.dot_dimension_numbers<[2], [2], [1], [1], [0, 0, 0, 1, 1, 1], [0], [0]>} : vector<2x8x8xf32>, vector<2x8x8xf32>, vector<2x8x8xf32> -> vector<2x8x8xf32>
    "tpu.trace_stop"() : () -> ()
    %cst_9 = arith.constant dense<0xFF800000> : vector<2x8xf32>
    %34 = vector.multi_reduction <maximumf>, %33, %cst_9 [2] : vector<2x8x8xf32> to vector<2x8xf32>
    %35 = vector.shape_cast %34 : vector<2x8xf32> to vector<2x8x1xf32>
    %36 = vector.broadcast %35 : vector<2x8x1xf32> to vector<2x8x8xf32>
    %37 = arith.subf %33, %36 : vector<2x8x8xf32>
    %38 = math.exp %37 : vector<2x8x8xf32>
    %cst_10 = arith.constant dense<0.000000e+00> : vector<2x8xf32>
    %39 = vector.multi_reduction <add>, %38, %cst_10 [2] : vector<2x8x8xf32> to vector<2x8xf32>
    %40 = vector.shape_cast %39 : vector<2x8xf32> to vector<2x8x1xf32>
    %41 = vector.broadcast %40 : vector<2x8x1xf32> to vector<2x8x8xf32>
    %42 = arith.divf %38, %41 : vector<2x8x8xf32>
    "tpu.trace_start"() <{level = 10 : i32, message = "bst,btd->bsd"}> : () -> ()
    %cst_11 = arith.constant dense<0.000000e+00> : vector<2x8x8xf32>
    %43 = tpu.matmul %42, %32, %cst_11 {dimension_numbers = #tpu.dot_dimension_numbers<[2], [1], [1], [2], [0, 0, 0, 1, 1, 2], [0], [0]>} : vector<2x8x8xf32>, vector<2x8x8xf32>, vector<2x8x8xf32> -> vector<2x8x8xf32>
    "tpu.trace_stop"() : () -> ()
    %44 = vector.shape_cast %43 : vector<2x8x8xf32> to vector<16x8xf32>
    %45 = vector.extract_strided_slice %6 {offsets = [0, 16], sizes = [16, 8], strides = [1, 1]} : vector<16x32xf32> to vector<16x8xf32>
    %46 = vector.shape_cast %45 : vector<16x8xf32> to vector<2x8x8xf32>
    %47 = vector.extract_strided_slice %7 {offsets = [0, 16], sizes = [16, 8], strides = [1, 1]} : vector<16x32xf32> to vector<16x8xf32>
    %48 = vector.shape_cast %47 : vector<16x8xf32> to vector<2x8x8xf32>
    %49 = vector.extract_strided_slice %8 {offsets = [0, 16], sizes = [16, 8], strides = [1, 1]} : vector<16x32xf32> to vector<16x8xf32>
    %50 = vector.shape_cast %49 : vector<16x8xf32> to vector<2x8x8xf32>
    "tpu.trace_start"() <{level = 10 : i32, message = "bsd,btd->bst"}> : () -> ()
    %cst_12 = arith.constant dense<0.000000e+00> : vector<2x8x8xf32>
    %51 = tpu.matmul %46, %48, %cst_12 {dimension_numbers = #tpu.dot_dimension_numbers<[2], [2], [1], [1], [0, 0, 0, 1, 1, 1], [0], [0]>} : vector<2x8x8xf32>, vector<2x8x8xf32>, vector<2x8x8xf32> -> vector<2x8x8xf32>
    "tpu.trace_stop"() : () -> ()
    %cst_13 = arith.constant dense<0xFF800000> : vector<2x8xf32>
    %52 = vector.multi_reduction <maximumf>, %51, %cst_13 [2] : vector<2x8x8xf32> to vector<2x8xf32>
    %53 = vector.shape_cast %52 : vector<2x8xf32> to vector<2x8x1xf32>
    %54 = vector.broadcast %53 : vector<2x8x1xf32> to vector<2x8x8xf32>
    %55 = arith.subf %51, %54 : vector<2x8x8xf32>
    %56 = math.exp %55 : vector<2x8x8xf32>
    %cst_14 = arith.constant dense<0.000000e+00> : vector<2x8xf32>
    %57 = vector.multi_reduction <add>, %56, %cst_14 [2] : vector<2x8x8xf32> to vector<2x8xf32>
    %58 = vector.shape_cast %57 : vector<2x8xf32> to vector<2x8x1xf32>
    %59 = vector.broadcast %58 : vector<2x8x1xf32> to vector<2x8x8xf32>
    %60 = arith.divf %56, %59 : vector<2x8x8xf32>
    "tpu.trace_start"() <{level = 10 : i32, message = "bst,btd->bsd"}> : () -> ()
    %cst_15 = arith.constant dense<0.000000e+00> : vector<2x8x8xf32>
    %61 = tpu.matmul %60, %50, %cst_15 {dimension_numbers = #tpu.dot_dimension_numbers<[2], [1], [1], [2], [0, 0, 0, 1, 1, 2], [0], [0]>} : vector<2x8x8xf32>, vector<2x8x8xf32>, vector<2x8x8xf32> -> vector<2x8x8xf32>
    "tpu.trace_stop"() : () -> ()
    %62 = vector.shape_cast %61 : vector<2x8x8xf32> to vector<16x8xf32>
    %63 = vector.extract_strided_slice %6 {offsets = [0, 24], sizes = [16, 8], strides = [1, 1]} : vector<16x32xf32> to vector<16x8xf32>
    %64 = vector.shape_cast %63 : vector<16x8xf32> to vector<2x8x8xf32>
    %65 = vector.extract_strided_slice %7 {offsets = [0, 24], sizes = [16, 8], strides = [1, 1]} : vector<16x32xf32> to vector<16x8xf32>
    %66 = vector.shape_cast %65 : vector<16x8xf32> to vector<2x8x8xf32>
    %67 = vector.extract_strided_slice %8 {offsets = [0, 24], sizes = [16, 8], strides = [1, 1]} : vector<16x32xf32> to vector<16x8xf32>
    %68 = vector.shape_cast %67 : vector<16x8xf32> to vector<2x8x8xf32>
    "tpu.trace_start"() <{level = 10 : i32, message = "bsd,btd->bst"}> : () -> ()
    %cst_16 = arith.constant dense<0.000000e+00> : vector<2x8x8xf32>
    %69 = tpu.matmul %64, %66, %cst_16 {dimension_numbers = #tpu.dot_dimension_numbers<[2], [2], [1], [1], [0, 0, 0, 1, 1, 1], [0], [0]>} : vector<2x8x8xf32>, vector<2x8x8xf32>, vector<2x8x8xf32> -> vector<2x8x8xf32>
    "tpu.trace_stop"() : () -> ()
    %cst_17 = arith.constant dense<0xFF800000> : vector<2x8xf32>
    %70 = vector.multi_reduction <maximumf>, %69, %cst_17 [2] : vector<2x8x8xf32> to vector<2x8xf32>
    %71 = vector.shape_cast %70 : vector<2x8xf32> to vector<2x8x1xf32>
    %72 = vector.broadcast %71 : vector<2x8x1xf32> to vector<2x8x8xf32>
    %73 = arith.subf %69, %72 : vector<2x8x8xf32>
    %74 = math.exp %73 : vector<2x8x8xf32>
    %cst_18 = arith.constant dense<0.000000e+00> : vector<2x8xf32>
    %75 = vector.multi_reduction <add>, %74, %cst_18 [2] : vector<2x8x8xf32> to vector<2x8xf32>
    %76 = vector.shape_cast %75 : vector<2x8xf32> to vector<2x8x1xf32>
    %77 = vector.broadcast %76 : vector<2x8x1xf32> to vector<2x8x8xf32>
    %78 = arith.divf %74, %77 : vector<2x8x8xf32>
    "tpu.trace_start"() <{level = 10 : i32, message = "bst,btd->bsd"}> : () -> ()
    %cst_19 = arith.constant dense<0.000000e+00> : vector<2x8x8xf32>
    %79 = tpu.matmul %78, %68, %cst_19 {dimension_numbers = #tpu.dot_dimension_numbers<[2], [1], [1], [2], [0, 0, 0, 1, 1, 2], [0], [0]>} : vector<2x8x8xf32>, vector<2x8x8xf32>, vector<2x8x8xf32> -> vector<2x8x8xf32>
    "tpu.trace_stop"() : () -> ()
    %80 = vector.shape_cast %79 : vector<2x8x8xf32> to vector<16x8xf32>
    %81 = tpu.concatenate %26, %44, %62, %80 in 1 : vector<16x8xf32>, vector<16x8xf32>, vector<16x8xf32>, vector<16x8xf32> -> vector<16x32xf32>
    %c0_20 = arith.constant 0 : index
    %c96_21 = arith.constant 96 : index
    %82 = vector.load %arg2[%c0_20, %c96_21] : memref<104x128xf32, #tpu.memory_space<vmem>>, vector<32x32xf32>
    %cst_22 = arith.constant dense<0.000000e+00> : vector<16x32xf32>
    %83 = tpu.matmul %81, %82, %cst_22 {dimension_numbers = #tpu.dot_dimension_numbers<[1], [0], [0], [1], [0, 0, 1, 1], [], []>} : vector<16x32xf32>, vector<32x32xf32>, vector<16x32xf32> -> vector<16x32xf32>
    %c96_23 = arith.constant 96 : index
    %c96_24 = arith.constant 96 : index
    %84 = vector.load %arg2[%c96_23, %c96_24] : memref<104x128xf32, #tpu.memory_space<vmem>>, vector<1x32xf32>
    %85 = vector.broadcast %84 : vector<1x32xf32> to vector<16x32xf32>
    %86 = arith.addf %83, %85 : vector<16x32xf32>
    %87 = arith.addf %86, %0 : vector<16x32xf32>
    %c98 = arith.constant 98 : index
    %c0_25 = arith.constant 0 : index
    %88 = vector.load %arg2[%c98, %c0_25] : memref<104x128xf32, #tpu.memory_space<vmem>>, vector<1x32xf32>
    %c98_26 = arith.constant 98 : index
    %c32 = arith.constant 32 : index
    %89 = vector.load %arg2[%c98_26, %c32] : memref<104x128xf32, #tpu.memory_space<vmem>>, vector<1x32xf32>
    %cst_27 = arith.constant dense<0.000000e+00> : vector<16xf32>
    %90 = vector.multi_reduction <add>, %87, %cst_27 [1] : vector<16x32xf32> to vector<16xf32>
    %91 = vector.shape_cast %90 : vector<16xf32> to vector<16x1xf32>
    %cst_28 = arith.constant 3.200000e+01 : f32
    %92 = vector.broadcast %cst_28 : f32 to vector<16x1xf32>
    %93 = arith.divf %91, %92 : vector<16x1xf32>
    %94 = vector.broadcast %93 : vector<16x1xf32> to vector<16x32xf32>
    %95 = arith.subf %87, %94 : vector<16x32xf32>
    %96 = arith.mulf %95, %95 : vector<16x32xf32>
    %cst_29 = arith.constant dense<0.000000e+00> : vector<16xf32>
    %97 = vector.multi_reduction <add>, %96, %cst_29 [1] : vector<16x32xf32> to vector<16xf32>
    %98 = vector.shape_cast %97 : vector<16xf32> to vector<16x1xf32>
    %cst_30 = arith.constant 3.200000e+01 : f32
    %99 = vector.broadcast %cst_30 : f32 to vector<16x1xf32>
    %100 = arith.divf %98, %99 : vector<16x1xf32>
    %101 = vector.broadcast %93 : vector<16x1xf32> to vector<16x32xf32>
    %102 = arith.subf %87, %101 : vector<16x32xf32>
    %cst_31 = arith.constant 9.99999996E-13 : f32
    %103 = vector.broadcast %cst_31 : f32 to vector<16x1xf32>
    %104 = arith.addf %100, %103 : vector<16x1xf32>
    %105 = math.rsqrt %104 : vector<16x1xf32>
    %106 = vector.broadcast %105 : vector<16x1xf32> to vector<16x32xf32>
    %107 = arith.mulf %102, %106 : vector<16x32xf32>
    %108 = vector.broadcast %88 : vector<1x32xf32> to vector<16x32xf32>
    %109 = arith.mulf %107, %108 : vector<16x32xf32>
    %110 = vector.broadcast %89 : vector<1x32xf32> to vector<16x32xf32>
    %111 = arith.addf %109, %110 : vector<16x32xf32>
    %c32_32 = arith.constant 32 : index
    %c0_33 = arith.constant 0 : index
    %112 = vector.load %arg2[%c32_32, %c0_33] : memref<104x128xf32, #tpu.memory_space<vmem>>, vector<32x64xf32>
    %cst_34 = arith.constant dense<0.000000e+00> : vector<16x64xf32>
    %113 = tpu.matmul %111, %112, %cst_34 {dimension_numbers = #tpu.dot_dimension_numbers<[1], [0], [0], [1], [0, 0, 1, 1], [], []>} : vector<16x32xf32>, vector<32x64xf32>, vector<16x64xf32> -> vector<16x64xf32>
    %c97 = arith.constant 97 : index
    %c0_35 = arith.constant 0 : index
    %114 = vector.load %arg2[%c97, %c0_35] : memref<104x128xf32, #tpu.memory_space<vmem>>, vector<1x64xf32>
    %115 = vector.broadcast %114 : vector<1x64xf32> to vector<16x64xf32>
    %116 = arith.addf %113, %115 : vector<16x64xf32>
    %cst_36 = arith.constant 0.000000e+00 : f32
    %117 = vector.broadcast %cst_36 : f32 to vector<16x64xf32>
    %118 = arith.maximumf %116, %117 : vector<16x64xf32>
    %c32_37 = arith.constant 32 : index
    %c64 = arith.constant 64 : index
    %119 = vector.load %arg2[%c32_37, %c64] : memref<104x128xf32, #tpu.memory_space<vmem>>, vector<64x32xf32>
    %cst_38 = arith.constant dense<0.000000e+00> : vector<16x32xf32>
    %120 = tpu.matmul %118, %119, %cst_38 {dimension_numbers = #tpu.dot_dimension_numbers<[1], [0], [0], [1], [0, 0, 1, 1], [], []>} : vector<16x64xf32>, vector<64x32xf32>, vector<16x32xf32> -> vector<16x32xf32>
    %c97_39 = arith.constant 97 : index
    %c64_40 = arith.constant 64 : index
    %121 = vector.load %arg2[%c97_39, %c64_40] : memref<104x128xf32, #tpu.memory_space<vmem>>, vector<1x32xf32>
    %122 = vector.broadcast %121 : vector<1x32xf32> to vector<16x32xf32>
    %123 = arith.addf %120, %122 : vector<16x32xf32>
    %124 = arith.addf %123, %111 : vector<16x32xf32>
    %c98_41 = arith.constant 98 : index
    %c64_42 = arith.constant 64 : index
    %125 = vector.load %arg2[%c98_41, %c64_42] : memref<104x128xf32, #tpu.memory_space<vmem>>, vector<1x32xf32>
    %c98_43 = arith.constant 98 : index
    %c96_44 = arith.constant 96 : index
    %126 = vector.load %arg2[%c98_43, %c96_44] : memref<104x128xf32, #tpu.memory_space<vmem>>, vector<1x32xf32>
    %cst_45 = arith.constant dense<0.000000e+00> : vector<16xf32>
    %127 = vector.multi_reduction <add>, %124, %cst_45 [1] : vector<16x32xf32> to vector<16xf32>
    %128 = vector.shape_cast %127 : vector<16xf32> to vector<16x1xf32>
    %cst_46 = arith.constant 3.200000e+01 : f32
    %129 = vector.broadcast %cst_46 : f32 to vector<16x1xf32>
    %130 = arith.divf %128, %129 : vector<16x1xf32>
    %131 = vector.broadcast %130 : vector<16x1xf32> to vector<16x32xf32>
    %132 = arith.subf %124, %131 : vector<16x32xf32>
    %133 = arith.mulf %132, %132 : vector<16x32xf32>
    %cst_47 = arith.constant dense<0.000000e+00> : vector<16xf32>
    %134 = vector.multi_reduction <add>, %133, %cst_47 [1] : vector<16x32xf32> to vector<16xf32>
    %135 = vector.shape_cast %134 : vector<16xf32> to vector<16x1xf32>
    %cst_48 = arith.constant 3.200000e+01 : f32
    %136 = vector.broadcast %cst_48 : f32 to vector<16x1xf32>
    %137 = arith.divf %135, %136 : vector<16x1xf32>
    %138 = vector.broadcast %130 : vector<16x1xf32> to vector<16x32xf32>
    %139 = arith.subf %124, %138 : vector<16x32xf32>
    %cst_49 = arith.constant 9.99999996E-13 : f32
    %140 = vector.broadcast %cst_49 : f32 to vector<16x1xf32>
    %141 = arith.addf %137, %140 : vector<16x1xf32>
    %142 = math.rsqrt %141 : vector<16x1xf32>
    %143 = vector.broadcast %142 : vector<16x1xf32> to vector<16x32xf32>
    %144 = arith.mulf %139, %143 : vector<16x32xf32>
    %145 = vector.broadcast %125 : vector<1x32xf32> to vector<16x32xf32>
    %146 = arith.mulf %144, %145 : vector<16x32xf32>
    %147 = vector.broadcast %126 : vector<1x32xf32> to vector<16x32xf32>
    %148 = arith.addf %146, %147 : vector<16x32xf32>
    %c0_50 = arith.constant 0 : index
    %c0_51 = arith.constant 0 : index
    %149 = vector.load %arg3[%c0_50, %c0_51] : memref<16x32xf32, #tpu.memory_space<vmem>>, vector<16x32xf32>
    tpu.vector_store %arg3[%c0_50, %c0_51], %148 {strides = array<i32>} : memref<16x32xf32, #tpu.memory_space<vmem>>, vector<16x32xf32>,
    return
  }
  func.func @transform_0(%arg0: i32) -> (i32, i32) {
    %c0_i32 = arith.constant 0 : i32
    %c0_i32_0 = arith.constant 0 : i32
    %c0_i32_1 = arith.constant 0 : i32
    return %c0_i32, %c0_i32_0 : i32, i32
  }
  func.func @transform_1(%arg0: i32) -> (i32, i32) {
    %c0_i32 = arith.constant 0 : i32
    %c0_i32_0 = arith.constant 0 : i32
    %c0_i32_1 = arith.constant 0 : i32
    return %c0_i32, %c0_i32_0 : i32, i32
  }
  func.func @transform_2(%arg0: i32) -> (i32, i32) {
    %c0_i32 = arith.constant 0 : i32
    %c0_i32_0 = arith.constant 0 : i32
    %c0_i32_1 = arith.constant 0 : i32
    return %c0_i32, %c0_i32_0 : i32, i32
  }
}

</mosaic_0001>

<llo_original>
// kernel: tpu_custom_call.1
$region0: #{tpu_custom_call.1}
  #allocation0 [shape = 'u32[]', space=smem, size = 0x4, offset = 0x4, fixed_abs, tag = 'smem constant byte address 0x4 - core index']
  #allocation1 [shape = 'u32[144,128]{1,0:T(1,128)}', space=vmem, size = 0x12000, scoped, tag = 'internal scratch']
  %s0 = inlined_call_operand.hbm [shape: f32[16,32], index: 0, kind: input, shape index: {}]
  %s1 = inlined_call_operand.hbm [shape: f32[104,128], index: 1, kind: input, shape index: {}]
  %s2 = inlined_call_operand.hbm [shape: f32[16,32], index: 2, kind: output, shape index: {}]
  %s3 = sld [smem:[#allocation0]]
  $region26: #{tpu_custom_call.1} parent=0
    _
  %s5 = ssub.s32 1, %s3
  %s6 = scalar_select 0, %s5, %s3
  $region1: #{tpu_custom_call.1} parent=0
    #allocation2 [shape = 'u8[8192]{0}', space=vmem, size = 0x2000, scoped, tag = 'input window, operand 0, single buffered']
    #allocation3 [shape = 's32[1]{0}', space=sflag, size = 0x4, scoped, tag = 'scoped memory for tpu_custom_call.1']
    #allocation4 [shape = 's32[1]{0}', space=sflag, size = 0x4, scoped, tag = 'scoped memory for tpu_custom_call.1']
    #allocation5 [shape = 'u8[53248]{0}', space=vmem, size = 0xd000, scoped, tag = 'input window, operand 1, single buffered']
    #allocation6 [shape = 's32[1]{0}', space=sflag, size = 0x4, scoped, tag = 'scoped memory for tpu_custom_call.1']
    #allocation7 [shape = 'u8[8192]{0}', space=vmem, size = 0x2000, scoped, tag = 'output window, operand 0, single buffered']
    %7 = vsyncpa [#allocation3], 0
    %8 = vsyncpa [#allocation6], 0
    %9 = vsyncpa [#allocation4], 0
    // Predicated region
    $region2: #{tpu_custom_call.1} parent=1 // pred_check
      _
    $region3: #{tpu_custom_call.1} parent=1 // pred_check_branch
      %11 = sbr.rel (0) target = $region5
    $region4: #{tpu_custom_call.1} parent=1 // pred_region
      %s13 = ssub.s32 256, 256
      %14 = vsyncadd [#allocation3], %s13
      %s15 = sshll.u32 [#allocation2], 4
      %s16 = int_to_ptr.vmem [resolvable:$true] %s15
      %21 = dma.hbm_to_vmem [thread:$0]  %s0, 256, %s16, [#allocation3], 128, 128, 8
    $region5: #{tpu_custom_call.1} parent=1 // pred_fallthru
      _
    // Predicated region
    $region6: #{tpu_custom_call.1} parent=1 // pred_check
      _
    $region7: #{tpu_custom_call.1} parent=1 // pred_check_branch
      %23 = sbr.rel (0) target = $region9
    $region8: #{tpu_custom_call.1} parent=1 // pred_region
      %s25 = ssub.s32 1664, 1664
      %26 = vsyncadd [#allocation6], %s25
      %s27 = sshll.u32 [#allocation5], 4
      %s28 = int_to_ptr.vmem [resolvable:$true] %s27
      %33 = dma.hbm_to_vmem [thread:$0]  %s1, 1664, %s28, [#allocation6], 128, 128, 8
    $region9: #{tpu_custom_call.1} parent=1 // pred_fallthru
      _
    // Predicated region
    $region10: #{tpu_custom_call.1} parent=1 // pred_check
      _
    $region11: #{tpu_custom_call.1} parent=1 // pred_check_branch
      %35 = sbr.rel (0) target = $region13
    $region12: #{tpu_custom_call.1} parent=1 // pred_region
      %36 = dma.done [#allocation3], 256
    $region13: #{tpu_custom_call.1} parent=1 // pred_fallthru
      _
    // Predicated region
    $region14: #{tpu_custom_call.1} parent=1 // pred_check
      _
    $region15: #{tpu_custom_call.1} parent=1 // pred_check_branch
      %38 = sbr.rel (0) target = $region17
    $region16: #{tpu_custom_call.1} parent=1 // pred_region
      %39 = dma.done [#allocation6], 1664
    $region17: #{tpu_custom_call.1} parent=1 // pred_fallthru
      _
    %v40 = vld [vmem:[#allocation2] sm:$0xff]
    %v41 = vld [vmem:[#allocation2 + $0x8] sm:$0xff]
    %v42 = vld [vmem:[#allocation5] sm:$0xff]
    %v43 = vld [vmem:[#allocation5 + $0x8] sm:$0xff]
    %v44 = vld [vmem:[#allocation5 + $0x10] sm:$0xff]
    %v45 = vld [vmem:[#allocation5 + $0x18] sm:$0xff]
    %v46 = vld [vmem:[#allocation5 + $0x60] sm:$0x1]
    %v47 = vlaneseq
    %v48 = vshrl.u32 %v47, 7
    %v49 = vsub.s32 0, %v48
    %v50 = vrot.slane %v46, %v49
    %vm51 = vcmask 261120
    %v53 = vsel %vm51, %v40, 0
    %v56 = vsel %vm51, %v41, 0
    %58 = vmatprep.subr.mxu0 0.0
    %59 = vmatpush1.msra.mxu0 0.0
    %60 = vmatprep.subr.mxu0 0.0
    %61 = vmatpush1.msra.mxu0 0.0
    %62 = vmatprep.subr.mxu0 0.0
    %63 = vmatpush1.msra.mxu0 0.0
    %64 = vmatprep.subr.mxu0 0.0
    %65 = vmatpush1.msra.mxu0 0.0
    %66 = vmatprep.subr.mxu0 0.0
    %67 = vmatpush1.msra.mxu0 0.0
    %68 = vmatprep.subr.mxu0 0.0
    %69 = vmatpush1.msra.mxu0 0.0
    %70 = vmatprep.subr.mxu0 0.0
    %71 = vmatpush1.msra.mxu0 0.0
    %72 = vmatprep.subr.mxu0 0.0
    %73 = vmatpush1.msra.mxu0 0.0
    %74 = vmatprep.subr.mxu0 0.0
    %75 = vmatpush1.msra.mxu0 0.0
    %76 = vmatprep.subr.mxu0 0.0
    %77 = vmatpush1.msra.mxu0 0.0
    %78 = vmatprep.subr.mxu0 0.0
    %79 = vmatpush1.msra.mxu0 0.0
    %80 = vmatprep.subr.mxu0 0.0
    %81 = vmatpush1.msra.mxu0 0.0
    %82 = vmatprep.subr.mxu0 0.0
    %83 = vmatpush1.msra.mxu0 %v45
    %84 = vmatprep.subr.mxu0 0.0
    %85 = vmatpush1.msra.mxu0 %v44
    %86 = vmatprep.subr.mxu0 0.0
    %87 = vmatpush1.msra.mxu0 %v43
    %88 = vmatprep.subr.mxu0 0.0
    %89 = vmatpush1.msra.mxu0 %v42
    %90 = vmatprep.subr.mxu0 0.0
    %91 = vmatpush2.msra.mxu0 0.0
    %92 = vmatprep.subr.mxu0 0.0
    %93 = vmatpush2.msra.mxu0 0.0
    %94 = vmatprep.subr.mxu0 0.0
    %95 = vmatpush2.msra.mxu0 0.0
    %96 = vmatprep.subr.mxu0 0.0
    %97 = vmatpush2.msra.mxu0 0.0
    %98 = vmatprep.subr.mxu0 0.0
    %99 = vmatpush2.msra.mxu0 0.0
    %100 = vmatprep.subr.mxu0 0.0
    %101 = vmatpush2.msra.mxu0 0.0
    %102 = vmatprep.subr.mxu0 0.0
    %103 = vmatpush2.msra.mxu0 0.0
    %104 = vmatprep.subr.mxu0 0.0
    %105 = vmatpush2.msra.mxu0 0.0
    %106 = vmatprep.subr.mxu0 0.0
    %107 = vmatpush2.msra.mxu0 0.0
    %108 = vmatprep.subr.mxu0 0.0
    %109 = vmatpush2.msra.mxu0 0.0
    %110 = vmatprep.subr.mxu0 0.0
    %111 = vmatpush2.msra.mxu0 0.0
    %112 = vmatprep.subr.mxu0 0.0
    %113 = vmatpush2.msra.mxu0 0.0
    %114 = vmatprep.subr.mxu0 0.0
    %115 = vmatpush2.msra.mxu0 0.0
    %116 = vmatprep.subr.mxu0 0.0
    %117 = vmatpush2.msra.mxu0 0.0
    %118 = vmatprep.subr.mxu0 0.0
    %119 = vmatpush2.msra.mxu0 0.0
    %120 = vmatprep.subr.mxu0 0.0
    %121 = vmatpush2.msra.mxu0 0.0
    %122 = vmatprep.mubr.f32.mxu0 0.0
    %123 = vmatmul.mubr.f32.gmra.mxu0 %v53
    %v124 = vpop.f32.mrf.mxu0
    %v125 = vadd.f32 %v50, %v124
    %v126 = vpop.f32.mrf.mxu0
    %127 = vmatprep.mubr.f32.mxu0 0.0
    %128 = vmatmul.mubr.f32.gmra.mxu0 %v56
    %v129 = vpop.f32.mrf.mxu0
    %v130 = vadd.f32 %v50, %v129
    %v131 = vpop.f32.mrf.mxu0
    %132 = vdwg.mxu0
    %134 = vrot.lane.b32.xlu0 %v125, 96
    %v135 = vpop.permute.xlu0 %134
    %vm136 = vcmask 64512
    %v137 = vsel %vm136, %v125, 0
    %v139 = vsel %vm136, %v135, 0
    %141 = vmatprep.subr.mxu0 0.0
    %142 = vmatpush1.xpose.msra.mxu0 0.0
    %143 = vmatprep.subr.mxu0 0.0
    %144 = vmatpush1.xpose.msra.mxu0 0.0
    %145 = vmatprep.subr.mxu0 0.0
    %146 = vmatpush1.xpose.msra.mxu0 0.0
    %147 = vmatprep.subr.mxu0 0.0
    %148 = vmatpush1.xpose.msra.mxu0 0.0
    %149 = vmatprep.subr.mxu0 0.0
    %150 = vmatpush1.xpose.msra.mxu0 0.0
    %151 = vmatprep.subr.mxu0 0.0
    %152 = vmatpush1.xpose.msra.mxu0 0.0
    %153 = vmatprep.subr.mxu0 0.0
    %154 = vmatpush1.xpose.msra.mxu0 0.0
    %155 = vmatprep.subr.mxu0 0.0
    %156 = vmatpush1.xpose.msra.mxu0 0.0
    %157 = vmatprep.subr.mxu0 0.0
    %158 = vmatpush1.xpose.msra.mxu0 0.0
    %159 = vmatprep.subr.mxu0 0.0
    %160 = vmatpush1.xpose.msra.mxu0 0.0
    %161 = vmatprep.subr.mxu0 0.0
    %162 = vmatpush1.xpose.msra.mxu0 0.0
    %163 = vmatprep.subr.mxu0 0.0
    %164 = vmatpush1.xpose.msra.mxu0 0.0
    %165 = vmatprep.subr.mxu0 0.0
    %166 = vmatpush1.xpose.msra.mxu0 0.0
    %167 = vmatprep.subr.mxu0 0.0
    %168 = vmatpush1.xpose.msra.mxu0 0.0
    %169 = vmatprep.subr.mxu0 0.0
    %170 = vmatpush1.xpose.msra.mxu0 0.0
    %171 = vmatprep.subr.mxu0 0.0
    %172 = vmatpush1.xpose.msra.mxu0 %v139
    %173 = vmatprep.subr.mxu0 0.0
    %174 = vmatpush2.xpose.msra.mxu0 0.0
    %175 = vmatprep.subr.mxu0 0.0
    %176 = vmatpush2.xpose.msra.mxu0 0.0
    %177 = vmatprep.subr.mxu0 0.0
    %178 = vmatpush2.xpose.msra.mxu0 0.0
    %179 = vmatprep.subr.mxu0 0.0
    %180 = vmatpush2.xpose.msra.mxu0 0.0
    %181 = vmatprep.subr.mxu0 0.0
    %182 = vmatpush2.xpose.msra.mxu0 0.0
    %183 = vmatprep.subr.mxu0 0.0
    %184 = vmatpush2.xpose.msra.mxu0 0.0
    %185 = vmatprep.subr.mxu0 0.0
    %186 = vmatpush2.xpose.msra.mxu0 0.0
    %187 = vmatprep.subr.mxu0 0.0
    %188 = vmatpush2.xpose.msra.mxu0 0.0
    %189 = vmatprep.subr.mxu0 0.0
    %190 = vmatpush2.xpose.msra.mxu0 0.0
    %191 = vmatprep.subr.mxu0 0.0
    %192 = vmatpush2.xpose.msra.mxu0 0.0
    %193 = vmatprep.subr.mxu0 0.0
    %194 = vmatpush2.xpose.msra.mxu0 0.0
    %195 = vmatprep.subr.mxu0 0.0
    %196 = vmatpush2.xpose.msra.mxu0 0.0
    %197 = vmatprep.subr.mxu0 0.0
    %198 = vmatpush2.xpose.msra.mxu0 0.0
    %199 = vmatprep.subr.mxu0 0.0
    %200 = vmatpush2.xpose.msra.mxu0 0.0
    %201 = vmatprep.subr.mxu0 0.0
    %202 = vmatpush2.xpose.msra.mxu0 0.0
    %203 = vmatprep.subr.mxu0 0.0
    %204 = vmatpush2.xpose.msra.mxu0 0.0
    %205 = vmatprep.mubr.f32.mxu0 0.0
    %206 = vmatmul.mubr.f32.gmra.mxu0 %v137
    %v207 = vpop.f32.mrf.mxu0
    %v208 = vadd.f32 0.0, %v207
    %v209 = vpop.f32.mrf.mxu0
    %210 = vdwg.mxu0
    %212 = vrot.lane.b32.xlu0 %v130, 96
    %v213 = vpop.permute.xlu0 %212
    %v214 = vsel %vm136, %v130, 0
    %v216 = vsel %vm136, %v213, 0
    %218 = vmatprep.subr.mxu0 0.0
    %219 = vmatpush1.xpose.msra.mxu0 0.0
    %220 = vmatprep.subr.mxu0 0.0
    %221 = vmatpush1.xpose.msra.mxu0 0.0
    %222 = vmatprep.subr.mxu0 0.0
    %223 = vmatpush1.xpose.msra.mxu0 0.0
    %224 = vmatprep.subr.mxu0 0.0
    %225 = vmatpush1.xpose.msra.mxu0 0.0
    %226 = vmatprep.subr.mxu0 0.0
    %227 = vmatpush1.xpose.msra.mxu0 0.0
    %228 = vmatprep.subr.mxu0 0.0
    %229 = vmatpush1.xpose.msra.mxu0 0.0
    %230 = vmatprep.subr.mxu0 0.0
    %231 = vmatpush1.xpose.msra.mxu0 0.0
    %232 = vmatprep.subr.mxu0 0.0
    %233 = vmatpush1.xpose.msra.mxu0 0.0
    %234 = vmatprep.subr.mxu0 0.0
    %235 = vmatpush1.xpose.msra.mxu0 0.0
    %236 = vmatprep.subr.mxu0 0.0
    %237 = vmatpush1.xpose.msra.mxu0 0.0
    %238 = vmatprep.subr.mxu0 0.0
    %239 = vmatpush1.xpose.msra.mxu0 0.0
    %240 = vmatprep.subr.mxu0 0.0
    %241 = vmatpush1.xpose.msra.mxu0 0.0
    %242 = vmatprep.subr.mxu0 0.0
    %243 = vmatpush1.xpose.msra.mxu0 0.0
    %244 = vmatprep.subr.mxu0 0.0
    %245 = vmatpush1.xpose.msra.mxu0 0.0
    %246 = vmatprep.subr.mxu0 0.0
    %247 = vmatpush1.xpose.msra.mxu0 0.0
    %248 = vmatprep.subr.mxu0 0.0
    %249 = vmatpush1.xpose.msra.mxu0 %v216
    %250 = vmatprep.subr.mxu0 0.0
    %251 = vmatpush2.xpose.msra.mxu0 0.0
    %252 = vmatprep.subr.mxu0 0.0
    %253 = vmatpush2.xpose.msra.mxu0 0.0
    %254 = vmatprep.subr.mxu0 0.0
    %255 = vmatpush2.xpose.msra.mxu0 0.0
    %256 = vmatprep.subr.mxu0 0.0
    %257 = vmatpush2.xpose.msra.mxu0 0.0
    %258 = vmatprep.subr.mxu0 0.0
    %259 = vmatpush2.xpose.msra.mxu0 0.0
    %260 = vmatprep.subr.mxu0 0.0
    %261 = vmatpush2.xpose.msra.mxu0 0.0
    %262 = vmatprep.subr.mxu0 0.0
    %263 = vmatpush2.xpose.msra.mxu0 0.0
    %264 = vmatprep.subr.mxu0 0.0
    %265 = vmatpush2.xpose.msra.mxu0 0.0
    %266 = vmatprep.subr.mxu0 0.0
    %267 = vmatpush2.xpose.msra.mxu0 0.0
    %268 = vmatprep.subr.mxu0 0.0
    %269 = vmatpush2.xpose.msra.mxu0 0.0
    %270 = vmatprep.subr.mxu0 0.0
    %271 = vmatpush2.xpose.msra.mxu0 0.0
    %272 = vmatprep.subr.mxu0 0.0
    %273 = vmatpush2.xpose.msra.mxu0 0.0
    %274 = vmatprep.subr.mxu0 0.0
    %275 = vmatpush2.xpose.msra.mxu0 0.0
    %276 = vmatprep.subr.mxu0 0.0
    %277 = vmatpush2.xpose.msra.mxu0 0.0
    %278 = vmatprep.subr.mxu0 0.0
    %279 = vmatpush2.xpose.msra.mxu0 0.0
    %280 = vmatprep.subr.mxu0 0.0
    %281 = vmatpush2.xpose.msra.mxu0 0.0
    %282 = vmatprep.mubr.f32.mxu0 0.0
    %283 = vmatmul.mubr.f32.gmra.mxu0 %v214
    %v284 = vpop.f32.mrf.mxu0
    %v285 = vadd.f32 0.0, %v284
    %v286 = vpop.f32.mrf.mxu0
    %287 = vdwg.mxu0
    %v288 = vsel %vm136, %v208, -inf
    %289 = vmax.xlane.f32.xlu0 %v288
    %v290 = vpop.xlane.xlu0 %289
    %v291 = vsel %vm136, %v285, -inf
    %292 = vmax.xlane.f32.xlu0 %v291
    %v293 = vpop.xlane.xlu0 %292
    %v294 = vsub.f32 %v208, %v290
    %v295 = vsub.f32 %v285, %v293
    %v296 = vmul.f32 %v294, 1.442695
    %v297 = vpow.pop %v296
    %v298 = vmul.f32 %v295, 1.442695
    %v299 = vpow.pop %v298
    %v300 = vsel %vm136, %v297, 0.0
    %301 = vadd.xlane.f32.xlu0 %v300
    %v302 = vpop.xlane.xlu0 %301
    %v303 = vsel %vm136, %v299, 0.0
    %304 = vadd.xlane.f32.xlu0 %v303
    %v305 = vpop.xlane.xlu0 %304
    %v306 = vrcp.pop %v302
    %v307 = vmul.f32 %v297, %v306
    %v308 = vrcp.pop %v305
    %v309 = vmul.f32 %v299, %v308
    %310 = vrot.lane.b32.xlu0 %v125, 64
    %v311 = vpop.permute.xlu0 %310
    %v314 = vsel %vm136, %v307, 0
    %316 = vmatprep.subr.mxu0 0.0
    %317 = vmatpush1.msra.mxu0 0.0
    %318 = vmatprep.subr.mxu0 0.0
    %319 = vmatpush1.msra.mxu0 0.0
    %320 = vmatprep.subr.mxu0 0.0
    %321 = vmatpush1.msra.mxu0 0.0
    %322 = vmatprep.subr.mxu0 0.0
    %323 = vmatpush1.msra.mxu0 0.0
    %324 = vmatprep.subr.mxu0 0.0
    %325 = vmatpush1.msra.mxu0 0.0
    %326 = vmatprep.subr.mxu0 0.0
    %327 = vmatpush1.msra.mxu0 0.0
    %328 = vmatprep.subr.mxu0 0.0
    %329 = vmatpush1.msra.mxu0 0.0
    %330 = vmatprep.subr.mxu0 0.0
    %331 = vmatpush1.msra.mxu0 0.0
    %332 = vmatprep.subr.mxu0 0.0
    %333 = vmatpush1.msra.mxu0 0.0
    %334 = vmatprep.subr.mxu0 0.0
    %335 = vmatpush1.msra.mxu0 0.0
    %336 = vmatprep.subr.mxu0 0.0
    %337 = vmatpush1.msra.mxu0 0.0
    %338 = vmatprep.subr.mxu0 0.0
    %339 = vmatpush1.msra.mxu0 0.0
    %340 = vmatprep.subr.mxu0 0.0
    %341 = vmatpush1.msra.mxu0 0.0
    %342 = vmatprep.subr.mxu0 0.0
    %343 = vmatpush1.msra.mxu0 0.0
    %344 = vmatprep.subr.mxu0 0.0
    %345 = vmatpush1.msra.mxu0 0.0
    %346 = vmatprep.subr.mxu0 0.0
    %347 = vmatpush1.msra.mxu0 %v311
    %348 = vmatprep.subr.mxu0 0.0
    %349 = vmatpush2.msra.mxu0 0.0
    %350 = vmatprep.subr.mxu0 0.0
    %351 = vmatpush2.msra.mxu0 0.0
    %352 = vmatprep.subr.mxu0 0.0
    %353 = vmatpush2.msra.mxu0 0.0
    %354 = vmatprep.subr.mxu0 0.0
    %355 = vmatpush2.msra.mxu0 0.0
    %356 = vmatprep.subr.mxu0 0.0
    %357 = vmatpush2.msra.mxu0 0.0
    %358 = vmatprep.subr.mxu0 0.0
    %359 = vmatpush2.msra.mxu0 0.0
    %360 = vmatprep.subr.mxu0 0.0
    %361 = vmatpush2.msra.mxu0 0.0
    %362 = vmatprep.subr.mxu0 0.0
    %363 = vmatpush2.msra.mxu0 0.0
    %364 = vmatprep.subr.mxu0 0.0
    %365 = vmatpush2.msra.mxu0 0.0
    %366 = vmatprep.subr.mxu0 0.0
    %367 = vmatpush2.msra.mxu0 0.0
    %368 = vmatprep.subr.mxu0 0.0
    %369 = vmatpush2.msra.mxu0 0.0
    %370 = vmatprep.subr.mxu0 0.0
    %371 = vmatpush2.msra.mxu0 0.0
    %372 = vmatprep.subr.mxu0 0.0
    %373 = vmatpush2.msra.mxu0 0.0
    %374 = vmatprep.subr.mxu0 0.0
    %375 = vmatpush2.msra.mxu0 0.0
    %376 = vmatprep.subr.mxu0 0.0
    %377 = vmatpush2.msra.mxu0 0.0
    %378 = vmatprep.subr.mxu0 0.0
    %379 = vmatpush2.msra.mxu0 0.0
    %380 = vmatprep.mubr.f32.mxu0 0.0
    %381 = vmatmul.mubr.f32.gmra.mxu0 %v314
    %v382 = vpop.f32.mrf.mxu0
    %v383 = vadd.f32 0.0, %v382
    %v384 = vpop.f32.mrf.mxu0
    %385 = vdwg.mxu0
    %386 = vrot.lane.b32.xlu0 %v130, 64
    %v387 = vpop.permute.xlu0 %386
    %v390 = vsel %vm136, %v309, 0
    %392 = vmatprep.subr.mxu0 0.0
    %393 = vmatpush1.msra.mxu0 0.0
    %394 = vmatprep.subr.mxu0 0.0
    %395 = vmatpush1.msra.mxu0 0.0
    %396 = vmatprep.subr.mxu0 0.0
    %397 = vmatpush1.msra.mxu0 0.0
    %398 = vmatprep.subr.mxu0 0.0
    %399 = vmatpush1.msra.mxu0 0.0
    %400 = vmatprep.subr.mxu0 0.0
    %401 = vmatpush1.msra.mxu0 0.0
    %402 = vmatprep.subr.mxu0 0.0
    %403 = vmatpush1.msra.mxu0 0.0
    %404 = vmatprep.subr.mxu0 0.0
    %405 = vmatpush1.msra.mxu0 0.0
    %406 = vmatprep.subr.mxu0 0.0
    %407 = vmatpush1.msra.mxu0 0.0
    %408 = vmatprep.subr.mxu0 0.0
    %409 = vmatpush1.msra.mxu0 0.0
    %410 = vmatprep.subr.mxu0 0.0
    %411 = vmatpush1.msra.mxu0 0.0
    %412 = vmatprep.subr.mxu0 0.0
    %413 = vmatpush1.msra.mxu0 0.0
    %414 = vmatprep.subr.mxu0 0.0
    %415 = vmatpush1.msra.mxu0 0.0
    %416 = vmatprep.subr.mxu0 0.0
    %417 = vmatpush1.msra.mxu0 0.0
    %418 = vmatprep.subr.mxu0 0.0
    %419 = vmatpush1.msra.mxu0 0.0
    %420 = vmatprep.subr.mxu0 0.0
    %421 = vmatpush1.msra.mxu0 0.0
    %422 = vmatprep.subr.mxu0 0.0
    %423 = vmatpush1.msra.mxu0 %v387
    %424 = vmatprep.subr.mxu0 0.0
    %425 = vmatpush2.msra.mxu0 0.0
    %426 = vmatprep.subr.mxu0 0.0
    %427 = vmatpush2.msra.mxu0 0.0
    %428 = vmatprep.subr.mxu0 0.0
    %429 = vmatpush2.msra.mxu0 0.0
    %430 = vmatprep.subr.mxu0 0.0
    %431 = vmatpush2.msra.mxu0 0.0
    %432 = vmatprep.subr.mxu0 0.0
    %433 = vmatpush2.msra.mxu0 0.0
    %434 = vmatprep.subr.mxu0 0.0
    %435 = vmatpush2.msra.mxu0 0.0
    %436 = vmatprep.subr.mxu0 0.0
    %437 = vmatpush2.msra.mxu0 0.0
    %438 = vmatprep.subr.mxu0 0.0
    %439 = vmatpush2.msra.mxu0 0.0
    %440 = vmatprep.subr.mxu0 0.0
    %441 = vmatpush2.msra.mxu0 0.0
    %442 = vmatprep.subr.mxu0 0.0
    %443 = vmatpush2.msra.mxu0 0.0
    %444 = vmatprep.subr.mxu0 0.0
    %445 = vmatpush2.msra.mxu0 0.0
    %446 = vmatprep.subr.mxu0 0.0
    %447 = vmatpush2.msra.mxu0 0.0
    %448 = vmatprep.subr.mxu0 0.0
    %449 = vmatpush2.msra.mxu0 0.0
    %450 = vmatprep.subr.mxu0 0.0
    %451 = vmatpush2.msra.mxu0 0.0
    %452 = vmatprep.subr.mxu0 0.0
    %453 = vmatpush2.msra.mxu0 0.0
    %454 = vmatprep.subr.mxu0 0.0
    %455 = vmatpush2.msra.mxu0 0.0
    %456 = vmatprep.mubr.f32.mxu0 0.0
    %457 = vmatmul.mubr.f32.gmra.mxu0 %v390
    %v458 = vpop.f32.mrf.mxu0
    %v459 = vadd.f32 0.0, %v458
    %v460 = vpop.f32.mrf.mxu0
    %461 = vdwg.mxu0
    %462 = vrot.lane.b32.xlu0 %v125, 120
    %v463 = vpop.permute.xlu0 %462
    %464 = vrot.lane.b32.xlu0 %v125, 88
    %v465 = vpop.permute.xlu0 %464
    %v466 = vsel %vm136, %v463, 0
    %v468 = vsel %vm136, %v465, 0
    %470 = vmatprep.subr.mxu0 0.0
    %471 = vmatpush1.xpose.msra.mxu0 0.0
    %472 = vmatprep.subr.mxu0 0.0
    %473 = vmatpush1.xpose.msra.mxu0 0.0
    %474 = vmatprep.subr.mxu0 0.0
    %475 = vmatpush1.xpose.msra.mxu0 0.0
    %476 = vmatprep.subr.mxu0 0.0
    %477 = vmatpush1.xpose.msra.mxu0 0.0
    %478 = vmatprep.subr.mxu0 0.0
    %479 = vmatpush1.xpose.msra.mxu0 0.0
    %480 = vmatprep.subr.mxu0 0.0
    %481 = vmatpush1.xpose.msra.mxu0 0.0
    %482 = vmatprep.subr.mxu0 0.0
    %483 = vmatpush1.xpose.msra.mxu0 0.0
    %484 = vmatprep.subr.mxu0 0.0
    %485 = vmatpush1.xpose.msra.mxu0 0.0
    %486 = vmatprep.subr.mxu0 0.0
    %487 = vmatpush1.xpose.msra.mxu0 0.0
    %488 = vmatprep.subr.mxu0 0.0
    %489 = vmatpush1.xpose.msra.mxu0 0.0
    %490 = vmatprep.subr.mxu0 0.0
    %491 = vmatpush1.xpose.msra.mxu0 0.0
    %492 = vmatprep.subr.mxu0 0.0
    %493 = vmatpush1.xpose.msra.mxu0 0.0
    %494 = vmatprep.subr.mxu0 0.0
    %495 = vmatpush1.xpose.msra.mxu0 0.0
    %496 = vmatprep.subr.mxu0 0.0
    %497 = vmatpush1.xpose.msra.mxu0 0.0
    %498 = vmatprep.subr.mxu0 0.0
    %499 = vmatpush1.xpose.msra.mxu0 0.0
    %500 = vmatprep.subr.mxu0 0.0
    %501 = vmatpush1.xpose.msra.mxu0 %v468
    %502 = vmatprep.subr.mxu0 0.0
    %503 = vmatpush2.xpose.msra.mxu0 0.0
    %504 = vmatprep.subr.mxu0 0.0
    %505 = vmatpush2.xpose.msra.mxu0 0.0
    %506 = vmatprep.subr.mxu0 0.0
    %507 = vmatpush2.xpose.msra.mxu0 0.0
    %508 = vmatprep.subr.mxu0 0.0
    %509 = vmatpush2.xpose.msra.mxu0 0.0
    %510 = vmatprep.subr.mxu0 0.0
    %511 = vmatpush2.xpose.msra.mxu0 0.0
    %512 = vmatprep.subr.mxu0 0.0
    %513 = vmatpush2.xpose.msra.mxu0 0.0
    %514 = vmatprep.subr.mxu0 0.0
    %515 = vmatpush2.xpose.msra.mxu0 0.0
    %516 = vmatprep.subr.mxu0 0.0
    %517 = vmatpush2.xpose.msra.mxu0 0.0
    %518 = vmatprep.subr.mxu0 0.0
    %519 = vmatpush2.xpose.msra.mxu0 0.0
    %520 = vmatprep.subr.mxu0 0.0
    %521 = vmatpush2.xpose.msra.mxu0 0.0
    %522 = vmatprep.subr.mxu0 0.0
    %523 = vmatpush2.xpose.msra.mxu0 0.0
    %524 = vmatprep.subr.mxu0 0.0
    %525 = vmatpush2.xpose.msra.mxu0 0.0
    %526 = vmatprep.subr.mxu0 0.0
    %527 = vmatpush2.xpose.msra.mxu0 0.0
    %528 = vmatprep.subr.mxu0 0.0
    %529 = vmatpush2.xpose.msra.mxu0 0.0
    %530 = vmatprep.subr.mxu0 0.0
    %531 = vmatpush2.xpose.msra.mxu0 0.0
    %532 = vmatprep.subr.mxu0 0.0
    %533 = vmatpush2.xpose.msra.mxu0 0.0
    %534 = vmatprep.mubr.f32.mxu0 0.0
    %535 = vmatmul.mubr.f32.gmra.mxu0 %v466
    %v536 = vpop.f32.mrf.mxu0
    %v537 = vadd.f32 0.0, %v536
    %v538 = vpop.f32.mrf.mxu0
    %539 = vdwg.mxu0
    %540 = vrot.lane.b32.xlu0 %v130, 120
    %v541 = vpop.permute.xlu0 %540
    %542 = vrot.lane.b32.xlu0 %v130, 88
    %v543 = vpop.permute.xlu0 %542
    %v544 = vsel %vm136, %v541, 0
    %v546 = vsel %vm136, %v543, 0
    %548 = vmatprep.subr.mxu0 0.0
    %549 = vmatpush1.xpose.msra.mxu0 0.0
    %550 = vmatprep.subr.mxu0 0.0
    %551 = vmatpush1.xpose.msra.mxu0 0.0
    %552 = vmatprep.subr.mxu0 0.0
    %553 = vmatpush1.xpose.msra.mxu0 0.0
    %554 = vmatprep.subr.mxu0 0.0
    %555 = vmatpush1.xpose.msra.mxu0 0.0
    %556 = vmatprep.subr.mxu0 0.0
    %557 = vmatpush1.xpose.msra.mxu0 0.0
    %558 = vmatprep.subr.mxu0 0.0
    %559 = vmatpush1.xpose.msra.mxu0 0.0
    %560 = vmatprep.subr.mxu0 0.0
    %561 = vmatpush1.xpose.msra.mxu0 0.0
    %562 = vmatprep.subr.mxu0 0.0
    %563 = vmatpush1.xpose.msra.mxu0 0.0
    %564 = vmatprep.subr.mxu0 0.0
    %565 = vmatpush1.xpose.msra.mxu0 0.0
    %566 = vmatprep.subr.mxu0 0.0
    %567 = vmatpush1.xpose.msra.mxu0 0.0
    %568 = vmatprep.subr.mxu0 0.0
    %569 = vmatpush1.xpose.msra.mxu0 0.0
    %570 = vmatprep.subr.mxu0 0.0
    %571 = vmatpush1.xpose.msra.mxu0 0.0
    %572 = vmatprep.subr.mxu0 0.0
    %573 = vmatpush1.xpose.msra.mxu0 0.0
    %574 = vmatprep.subr.mxu0 0.0
    %575 = vmatpush1.xpose.msra.mxu0 0.0
    %576 = vmatprep.subr.mxu0 0.0
    %577 = vmatpush1.xpose.msra.mxu0 0.0
    %578 = vmatprep.subr.mxu0 0.0
    %579 = vmatpush1.xpose.msra.mxu0 %v546
    %580 = vmatprep.subr.mxu0 0.0
    %581 = vmatpush2.xpose.msra.mxu0 0.0
    %582 = vmatprep.subr.mxu0 0.0
    %583 = vmatpush2.xpose.msra.mxu0 0.0
    %584 = vmatprep.subr.mxu0 0.0
    %585 = vmatpush2.xpose.msra.mxu0 0.0
    %586 = vmatprep.subr.mxu0 0.0
    %587 = vmatpush2.xpose.msra.mxu0 0.0
    %588 = vmatprep.subr.mxu0 0.0
    %589 = vmatpush2.xpose.msra.mxu0 0.0
    %590 = vmatprep.subr.mxu0 0.0
    %591 = vmatpush2.xpose.msra.mxu0 0.0
    %592 = vmatprep.subr.mxu0 0.0
    %593 = vmatpush2.xpose.msra.mxu0 0.0
    %594 = vmatprep.subr.mxu0 0.0
    %595 = vmatpush2.xpose.msra.mxu0 0.0
    %596 = vmatprep.subr.mxu0 0.0
    %597 = vmatpush2.xpose.msra.mxu0 0.0
    %598 = vmatprep.subr.mxu0 0.0
    %599 = vmatpush2.xpose.msra.mxu0 0.0
    %600 = vmatprep.subr.mxu0 0.0
    %601 = vmatpush2.xpose.msra.mxu0 0.0
    %602 = vmatprep.subr.mxu0 0.0
    %603 = vmatpush2.xpose.msra.mxu0 0.0
    %604 = vmatprep.subr.mxu0 0.0
    %605 = vmatpush2.xpose.msra.mxu0 0.0
    %606 = vmatprep.subr.mxu0 0.0
    %607 = vmatpush2.xpose.msra.mxu0 0.0
    %608 = vmatprep.subr.mxu0 0.0
    %609 = vmatpush2.xpose.msra.mxu0 0.0
    %610 = vmatprep.subr.mxu0 0.0
    %611 = vmatpush2.xpose.msra.mxu0 0.0
    %612 = vmatprep.mubr.f32.mxu0 0.0
    %613 = vmatmul.mubr.f32.gmra.mxu0 %v544
    %v614 = vpop.f32.mrf.mxu0
    %v615 = vadd.f32 0.0, %v614
    %v616 = vpop.f32.mrf.mxu0
    %617 = vdwg.mxu0
    %v618 = vsel %vm136, %v537, -inf
    %619 = vmax.xlane.f32.xlu0 %v618
    %v620 = vpop.xlane.xlu0 %619
    %v621 = vsel %vm136, %v615, -inf
    %622 = vmax.xlane.f32.xlu0 %v621
    %v623 = vpop.xlane.xlu0 %622
    %v624 = vsub.f32 %v537, %v620
    %v625 = vsub.f32 %v615, %v623
    %v626 = vmul.f32 %v624, 1.442695
    %v627 = vpow.pop %v626
    %v628 = vmul.f32 %v625, 1.442695
    %v629 = vpow.pop %v628
    %v630 = vsel %vm136, %v627, 0.0
    %631 = vadd.xlane.f32.xlu0 %v630
    %v632 = vpop.xlane.xlu0 %631
    %v633 = vsel %vm136, %v629, 0.0
    %634 = vadd.xlane.f32.xlu0 %v633
    %v635 = vpop.xlane.xlu0 %634
    %v636 = vrcp.pop %v632
    %v637 = vmul.f32 %v627, %v636
    %v638 = vrcp.pop %v635
    %v639 = vmul.f32 %v629, %v638
    %640 = vrot.lane.b32.xlu0 %v125, 56
    %v641 = vpop.permute.xlu0 %640
    %v644 = vsel %vm136, %v637, 0
    %646 = vmatprep.subr.mxu0 0.0
    %647 = vmatpush1.msra.mxu0 0.0
    %648 = vmatprep.subr.mxu0 0.0
    %649 = vmatpush1.msra.mxu0 0.0
    %650 = vmatprep.subr.mxu0 0.0
    %651 = vmatpush1.msra.mxu0 0.0
    %652 = vmatprep.subr.mxu0 0.0
    %653 = vmatpush1.msra.mxu0 0.0
    %654 = vmatprep.subr.mxu0 0.0
    %655 = vmatpush1.msra.mxu0 0.0
    %656 = vmatprep.subr.mxu0 0.0
    %657 = vmatpush1.msra.mxu0 0.0
    %658 = vmatprep.subr.mxu0 0.0
    %659 = vmatpush1.msra.mxu0 0.0
    %660 = vmatprep.subr.mxu0 0.0
    %661 = vmatpush1.msra.mxu0 0.0
    %662 = vmatprep.subr.mxu0 0.0
    %663 = vmatpush1.msra.mxu0 0.0
    %664 = vmatprep.subr.mxu0 0.0
    %665 = vmatpush1.msra.mxu0 0.0
    %666 = vmatprep.subr.mxu0 0.0
    %667 = vmatpush1.msra.mxu0 0.0
    %668 = vmatprep.subr.mxu0 0.0
    %669 = vmatpush1.msra.mxu0 0.0
    %670 = vmatprep.subr.mxu0 0.0
    %671 = vmatpush1.msra.mxu0 0.0
    %672 = vmatprep.subr.mxu0 0.0
    %673 = vmatpush1.msra.mxu0 0.0
    %674 = vmatprep.subr.mxu0 0.0
    %675 = vmatpush1.msra.mxu0 0.0
    %676 = vmatprep.subr.mxu0 0.0
    %677 = vmatpush1.msra.mxu0 %v641
    %678 = vmatprep.subr.mxu0 0.0
    %679 = vmatpush2.msra.mxu0 0.0
    %680 = vmatprep.subr.mxu0 0.0
    %681 = vmatpush2.msra.mxu0 0.0
    %682 = vmatprep.subr.mxu0 0.0
    %683 = vmatpush2.msra.mxu0 0.0
    %684 = vmatprep.subr.mxu0 0.0
    %685 = vmatpush2.msra.mxu0 0.0
    %686 = vmatprep.subr.mxu0 0.0
    %687 = vmatpush2.msra.mxu0 0.0
    %688 = vmatprep.subr.mxu0 0.0
    %689 = vmatpush2.msra.mxu0 0.0
    %690 = vmatprep.subr.mxu0 0.0
    %691 = vmatpush2.msra.mxu0 0.0
    %692 = vmatprep.subr.mxu0 0.0
    %693 = vmatpush2.msra.mxu0 0.0
    %694 = vmatprep.subr.mxu0 0.0
    %695 = vmatpush2.msra.mxu0 0.0
    %696 = vmatprep.subr.mxu0 0.0
    %697 = vmatpush2.msra.mxu0 0.0
    %698 = vmatprep.subr.mxu0 0.0
    %699 = vmatpush2.msra.mxu0 0.0
    %700 = vmatprep.subr.mxu0 0.0
    %701 = vmatpush2.msra.mxu0 0.0
    %702 = vmatprep.subr.mxu0 0.0
    %703 = vmatpush2.msra.mxu0 0.0
    %704 = vmatprep.subr.mxu0 0.0
    %705 = vmatpush2.msra.mxu0 0.0
    %706 = vmatprep.subr.mxu0 0.0
    %707 = vmatpush2.msra.mxu0 0.0
    %708 = vmatprep.subr.mxu0 0.0
    %709 = vmatpush2.msra.mxu0 0.0
    %710 = vmatprep.mubr.f32.mxu0 0.0
    %711 = vmatmul.mubr.f32.gmra.mxu0 %v644
    %v712 = vpop.f32.mrf.mxu0
    %v713 = vadd.f32 0.0, %v712
    %v714 = vpop.f32.mrf.mxu0
    %715 = vdwg.mxu0
    %716 = vrot.lane.b32.xlu0 %v130, 56
    %v717 = vpop.permute.xlu0 %716
    %v720 = vsel %vm136, %v639, 0
    %722 = vmatprep.subr.mxu0 0.0
    %723 = vmatpush1.msra.mxu0 0.0
    %724 = vmatprep.subr.mxu0 0.0
    %725 = vmatpush1.msra.mxu0 0.0
    %726 = vmatprep.subr.mxu0 0.0
    %727 = vmatpush1.msra.mxu0 0.0
    %728 = vmatprep.subr.mxu0 0.0
    %729 = vmatpush1.msra.mxu0 0.0
    %730 = vmatprep.subr.mxu0 0.0
    %731 = vmatpush1.msra.mxu0 0.0
    %732 = vmatprep.subr.mxu0 0.0
    %733 = vmatpush1.msra.mxu0 0.0
    %734 = vmatprep.subr.mxu0 0.0
    %735 = vmatpush1.msra.mxu0 0.0
    %736 = vmatprep.subr.mxu0 0.0
    %737 = vmatpush1.msra.mxu0 0.0
    %738 = vmatprep.subr.mxu0 0.0
    %739 = vmatpush1.msra.mxu0 0.0
    %740 = vmatprep.subr.mxu0 0.0
    %741 = vmatpush1.msra.mxu0 0.0
    %742 = vmatprep.subr.mxu0 0.0
    %743 = vmatpush1.msra.mxu0 0.0
    %744 = vmatprep.subr.mxu0 0.0
    %745 = vmatpush1.msra.mxu0 0.0
    %746 = vmatprep.subr.mxu0 0.0
    %747 = vmatpush1.msra.mxu0 0.0
    %748 = vmatprep.subr.mxu0 0.0
    %749 = vmatpush1.msra.mxu0 0.0
    %750 = vmatprep.subr.mxu0 0.0
    %751 = vmatpush1.msra.mxu0 0.0
    %752 = vmatprep.subr.mxu0 0.0
    %753 = vmatpush1.msra.mxu0 %v717
    %754 = vmatprep.subr.mxu0 0.0
    %755 = vmatpush2.msra.mxu0 0.0
    %756 = vmatprep.subr.mxu0 0.0
    %757 = vmatpush2.msra.mxu0 0.0
    %758 = vmatprep.subr.mxu0 0.0
    %759 = vmatpush2.msra.mxu0 0.0
    %760 = vmatprep.subr.mxu0 0.0
    %761 = vmatpush2.msra.mxu0 0.0
    %762 = vmatprep.subr.mxu0 0.0
    %763 = vmatpush2.msra.mxu0 0.0
    %764 = vmatprep.subr.mxu0 0.0
    %765 = vmatpush2.msra.mxu0 0.0
    %766 = vmatprep.subr.mxu0 0.0
    %767 = vmatpush2.msra.mxu0 0.0
    %768 = vmatprep.subr.mxu0 0.0
    %769 = vmatpush2.msra.mxu0 0.0
    %770 = vmatprep.subr.mxu0 0.0
    %771 = vmatpush2.msra.mxu0 0.0
    %772 = vmatprep.subr.mxu0 0.0
    %773 = vmatpush2.msra.mxu0 0.0
    %774 = vmatprep.subr.mxu0 0.0
    %775 = vmatpush2.msra.mxu0 0.0
    %776 = vmatprep.subr.mxu0 0.0
    %777 = vmatpush2.msra.mxu0 0.0
    %778 = vmatprep.subr.mxu0 0.0
    %779 = vmatpush2.msra.mxu0 0.0
    %780 = vmatprep.subr.mxu0 0.0
    %781 = vmatpush2.msra.mxu0 0.0
    %782 = vmatprep.subr.mxu0 0.0
    %783 = vmatpush2.msra.mxu0 0.0
    %784 = vmatprep.subr.mxu0 0.0
    %785 = vmatpush2.msra.mxu0 0.0
    %786 = vmatprep.mubr.f32.mxu0 0.0
    %787 = vmatmul.mubr.f32.gmra.mxu0 %v720
    %v788 = vpop.f32.mrf.mxu0
    %v789 = vadd.f32 0.0, %v788
    %v790 = vpop.f32.mrf.mxu0
    %791 = vdwg.mxu0
    %792 = vrot.lane.b32.xlu0 %v125, 112
    %v793 = vpop.permute.xlu0 %792
    %794 = vrot.lane.b32.xlu0 %v125, 80
    %v795 = vpop.permute.xlu0 %794
    %v796 = vsel %vm136, %v793, 0
    %v798 = vsel %vm136, %v795, 0
    %800 = vmatprep.subr.mxu0 0.0
    %801 = vmatpush1.xpose.msra.mxu0 0.0
    %802 = vmatprep.subr.mxu0 0.0
    %803 = vmatpush1.xpose.msra.mxu0 0.0
    %804 = vmatprep.subr.mxu0 0.0
    %805 = vmatpush1.xpose.msra.mxu0 0.0
    %806 = vmatprep.subr.mxu0 0.0
    %807 = vmatpush1.xpose.msra.mxu0 0.0
    %808 = vmatprep.subr.mxu0 0.0
    %809 = vmatpush1.xpose.msra.mxu0 0.0
    %810 = vmatprep.subr.mxu0 0.0
    %811 = vmatpush1.xpose.msra.mxu0 0.0
    %812 = vmatprep.subr.mxu0 0.0
    %813 = vmatpush1.xpose.msra.mxu0 0.0
    %814 = vmatprep.subr.mxu0 0.0
    %815 = vmatpush1.xpose.msra.mxu0 0.0
    %816 = vmatprep.subr.mxu0 0.0
    %817 = vmatpush1.xpose.msra.mxu0 0.0
    %818 = vmatprep.subr.mxu0 0.0
    %819 = vmatpush1.xpose.msra.mxu0 0.0
    %820 = vmatprep.subr.mxu0 0.0
    %821 = vmatpush1.xpose.msra.mxu0 0.0
    %822 = vmatprep.subr.mxu0 0.0
    %823 = vmatpush1.xpose.msra.mxu0 0.0
    %824 = vmatprep.subr.mxu0 0.0
    %825 = vmatpush1.xpose.msra.mxu0 0.0
    %826 = vmatprep.subr.mxu0 0.0
    %827 = vmatpush1.xpose.msra.mxu0 0.0
    %828 = vmatprep.subr.mxu0 0.0
    %829 = vmatpush1.xpose.msra.mxu0 0.0
    %830 = vmatprep.subr.mxu0 0.0
    %831 = vmatpush1.xpose.msra.mxu0 %v798
    %832 = vmatprep.subr.mxu0 0.0
    %833 = vmatpush2.xpose.msra.mxu0 0.0
    %834 = vmatprep.subr.mxu0 0.0
    %835 = vmatpush2.xpose.msra.mxu0 0.0
    %836 = vmatprep.subr.mxu0 0.0
    %837 = vmatpush2.xpose.msra.mxu0 0.0
    %838 = vmatprep.subr.mxu0 0.0
    %839 = vmatpush2.xpose.msra.mxu0 0.0
    %840 = vmatprep.subr.mxu0 0.0
    %841 = vmatpush2.xpose.msra.mxu0 0.0
    %842 = vmatprep.subr.mxu0 0.0
    %843 = vmatpush2.xpose.msra.mxu0 0.0
    %844 = vmatprep.subr.mxu0 0.0
    %845 = vmatpush2.xpose.msra.mxu0 0.0
    %846 = vmatprep.subr.mxu0 0.0
    %847 = vmatpush2.xpose.msra.mxu0 0.0
    %848 = vmatprep.subr.mxu0 0.0
    %849 = vmatpush2.xpose.msra.mxu0 0.0
    %850 = vmatprep.subr.mxu0 0.0
    %851 = vmatpush2.xpose.msra.mxu0 0.0
    %852 = vmatprep.subr.mxu0 0.0
    %853 = vmatpush2.xpose.msra.mxu0 0.0
    %854 = vmatprep.subr.mxu0 0.0
    %855 = vmatpush2.xpose.msra.mxu0 0.0
    %856 = vmatprep.subr.mxu0 0.0
    %857 = vmatpush2.xpose.msra.mxu0 0.0
    %858 = vmatprep.subr.mxu0 0.0
    %859 = vmatpush2.xpose.msra.mxu0 0.0
    %860 = vmatprep.subr.mxu0 0.0
    %861 = vmatpush2.xpose.msra.mxu0 0.0
    %862 = vmatprep.subr.mxu0 0.0
    %863 = vmatpush2.xpose.msra.mxu0 0.0
    %864 = vmatprep.mubr.f32.mxu0 0.0
    %865 = vmatmul.mubr.f32.gmra.mxu0 %v796
    %v866 = vpop.f32.mrf.mxu0
    %v867 = vadd.f32 0.0, %v866
    %v868 = vpop.f32.mrf.mxu0
    %869 = vdwg.mxu0
    %870 = vrot.lane.b32.xlu0 %v130, 112
    %v871 = vpop.permute.xlu0 %870
    %872 = vrot.lane.b32.xlu0 %v130, 80
    %v873 = vpop.permute.xlu0 %872
    %v874 = vsel %vm136, %v871, 0
    %v876 = vsel %vm136, %v873, 0
    %878 = vmatprep.subr.mxu0 0.0
    %879 = vmatpush1.xpose.msra.mxu0 0.0
    %880 = vmatprep.subr.mxu0 0.0
    %881 = vmatpush1.xpose.msra.mxu0 0.0
    %882 = vmatprep.subr.mxu0 0.0
    %883 = vmatpush1.xpose.msra.mxu0 0.0
    %884 = vmatprep.subr.mxu0 0.0
    %885 = vmatpush1.xpose.msra.mxu0 0.0
    %886 = vmatprep.subr.mxu0 0.0
    %887 = vmatpush1.xpose.msra.mxu0 0.0
    %888 = vmatprep.subr.mxu0 0.0
    %889 = vmatpush1.xpose.msra.mxu0 0.0
    %890 = vmatprep.subr.mxu0 0.0
    %891 = vmatpush1.xpose.msra.mxu0 0.0
    %892 = vmatprep.subr.mxu0 0.0
    %893 = vmatpush1.xpose.msra.mxu0 0.0
    %894 = vmatprep.subr.mxu0 0.0
    %895 = vmatpush1.xpose.msra.mxu0 0.0
    %896 = vmatprep.subr.mxu0 0.0
    %897 = vmatpush1.xpose.msra.mxu0 0.0
    %898 = vmatprep.subr.mxu0 0.0
    %899 = vmatpush1.xpose.msra.mxu0 0.0
    %900 = vmatprep.subr.mxu0 0.0
    %901 = vmatpush1.xpose.msra.mxu0 0.0
    %902 = vmatprep.subr.mxu0 0.0
    %903 = vmatpush1.xpose.msra.mxu0 0.0
    %904 = vmatprep.subr.mxu0 0.0
    %905 = vmatpush1.xpose.msra.mxu0 0.0
    %906 = vmatprep.subr.mxu0 0.0
    %907 = vmatpush1.xpose.msra.mxu0 0.0
    %908 = vmatprep.subr.mxu0 0.0
    %909 = vmatpush1.xpose.msra.mxu0 %v876
    %910 = vmatprep.subr.mxu0 0.0
    %911 = vmatpush2.xpose.msra.mxu0 0.0
    %912 = vmatprep.subr.mxu0 0.0
    %913 = vmatpush2.xpose.msra.mxu0 0.0
    %914 = vmatprep.subr.mxu0 0.0
    %915 = vmatpush2.xpose.msra.mxu0 0.0
    %916 = vmatprep.subr.mxu0 0.0
    %917 = vmatpush2.xpose.msra.mxu0 0.0
    %918 = vmatprep.subr.mxu0 0.0
    %919 = vmatpush2.xpose.msra.mxu0 0.0
    %920 = vmatprep.subr.mxu0 0.0
    %921 = vmatpush2.xpose.msra.mxu0 0.0
    %922 = vmatprep.subr.mxu0 0.0
    %923 = vmatpush2.xpose.msra.mxu0 0.0
    %924 = vmatprep.subr.mxu0 0.0
    %925 = vmatpush2.xpose.msra.mxu0 0.0
    %926 = vmatprep.subr.mxu0 0.0
    %927 = vmatpush2.xpose.msra.mxu0 0.0
    %928 = vmatprep.subr.mxu0 0.0
    %929 = vmatpush2.xpose.msra.mxu0 0.0
    %930 = vmatprep.subr.mxu0 0.0
    %931 = vmatpush2.xpose.msra.mxu0 0.0
    %932 = vmatprep.subr.mxu0 0.0
    %933 = vmatpush2.xpose.msra.mxu0 0.0
    %934 = vmatprep.subr.mxu0 0.0
    %935 = vmatpush2.xpose.msra.mxu0 0.0
    %936 = vmatprep.subr.mxu0 0.0
    %937 = vmatpush2.xpose.msra.mxu0 0.0
    %938 = vmatprep.subr.mxu0 0.0
    %939 = vmatpush2.xpose.msra.mxu0 0.0
    %940 = vmatprep.subr.mxu0 0.0
    %941 = vmatpush2.xpose.msra.mxu0 0.0
    %942 = vmatprep.mubr.f32.mxu0 0.0
    %943 = vmatmul.mubr.f32.gmra.mxu0 %v874
    %v944 = vpop.f32.mrf.mxu0
    %v945 = vadd.f32 0.0, %v944
    %v946 = vpop.f32.mrf.mxu0
    %947 = vdwg.mxu0
    %v948 = vsel %vm136, %v867, -inf
    %949 = vmax.xlane.f32.xlu0 %v948
    %v950 = vpop.xlane.xlu0 %949
    %v951 = vsel %vm136, %v945, -inf
    %952 = vmax.xlane.f32.xlu0 %v951
    %v953 = vpop.xlane.xlu0 %952
    %v954 = vsub.f32 %v867, %v950
    %v955 = vsub.f32 %v945, %v953
    %v956 = vmul.f32 %v954, 1.442695
    %v957 = vpow.pop %v956
    %v958 = vmul.f32 %v955, 1.442695
    %v959 = vpow.pop %v958
    %v960 = vsel %vm136, %v957, 0.0
    %961 = vadd.xlane.f32.xlu0 %v960
    %v962 = vpop.xlane.xlu0 %961
    %v963 = vsel %vm136, %v959, 0.0
    %964 = vadd.xlane.f32.xlu0 %v963
    %v965 = vpop.xlane.xlu0 %964
    %v966 = vrcp.pop %v962
    %v967 = vmul.f32 %v957, %v966
    %v968 = vrcp.pop %v965
    %v969 = vmul.f32 %v959, %v968
    %970 = vrot.lane.b32.xlu0 %v125, 48
    %v971 = vpop.permute.xlu0 %970
    %v974 = vsel %vm136, %v967, 0
    %976 = vmatprep.subr.mxu0 0.0
    %977 = vmatpush1.msra.mxu0 0.0
    %978 = vmatprep.subr.mxu0 0.0
    %979 = vmatpush1.msra.mxu0 0.0
    %980 = vmatprep.subr.mxu0 0.0
    %981 = vmatpush1.msra.mxu0 0.0
    %982 = vmatprep.subr.mxu0 0.0
    %983 = vmatpush1.msra.mxu0 0.0
    %984 = vmatprep.subr.mxu0 0.0
    %985 = vmatpush1.msra.mxu0 0.0
    %986 = vmatprep.subr.mxu0 0.0
    %987 = vmatpush1.msra.mxu0 0.0
    %988 = vmatprep.subr.mxu0 0.0
    %989 = vmatpush1.msra.mxu0 0.0
    %990 = vmatprep.subr.mxu0 0.0
    %991 = vmatpush1.msra.mxu0 0.0
    %992 = vmatprep.subr.mxu0 0.0
    %993 = vmatpush1.msra.mxu0 0.0
    %994 = vmatprep.subr.mxu0 0.0
    %995 = vmatpush1.msra.mxu0 0.0
    %996 = vmatprep.subr.mxu0 0.0
    %997 = vmatpush1.msra.mxu0 0.0
    %998 = vmatprep.subr.mxu0 0.0
    %999 = vmatpush1.msra.mxu0 0.0
    %1000 = vmatprep.subr.mxu0 0.0
    %1001 = vmatpush1.msra.mxu0 0.0
    %1002 = vmatprep.subr.mxu0 0.0
    %1003 = vmatpush1.msra.mxu0 0.0
    %1004 = vmatprep.subr.mxu0 0.0
    %1005 = vmatpush1.msra.mxu0 0.0
    %1006 = vmatprep.subr.mxu0 0.0
    %1007 = vmatpush1.msra.mxu0 %v971
    %1008 = vmatprep.subr.mxu0 0.0
    %1009 = vmatpush2.msra.mxu0 0.0
    %1010 = vmatprep.subr.mxu0 0.0
    %1011 = vmatpush2.msra.mxu0 0.0
    %1012 = vmatprep.subr.mxu0 0.0
    %1013 = vmatpush2.msra.mxu0 0.0
    %1014 = vmatprep.subr.mxu0 0.0
    %1015 = vmatpush2.msra.mxu0 0.0
    %1016 = vmatprep.subr.mxu0 0.0
    %1017 = vmatpush2.msra.mxu0 0.0
    %1018 = vmatprep.subr.mxu0 0.0
    %1019 = vmatpush2.msra.mxu0 0.0
    %1020 = vmatprep.subr.mxu0 0.0
    %1021 = vmatpush2.msra.mxu0 0.0
    %1022 = vmatprep.subr.mxu0 0.0
    %1023 = vmatpush2.msra.mxu0 0.0
    %1024 = vmatprep.subr.mxu0 0.0
    %1025 = vmatpush2.msra.mxu0 0.0
    %1026 = vmatprep.subr.mxu0 0.0
    %1027 = vmatpush2.msra.mxu0 0.0
    %1028 = vmatprep.subr.mxu0 0.0
    %1029 = vmatpush2.msra.mxu0 0.0
    %1030 = vmatprep.subr.mxu0 0.0
    %1031 = vmatpush2.msra.mxu0 0.0
    %1032 = vmatprep.subr.mxu0 0.0
    %1033 = vmatpush2.msra.mxu0 0.0
    %1034 = vmatprep.subr.mxu0 0.0
    %1035 = vmatpush2.msra.mxu0 0.0
    %1036 = vmatprep.subr.mxu0 0.0
    %1037 = vmatpush2.msra.mxu0 0.0
    %1038 = vmatprep.subr.mxu0 0.0
    %1039 = vmatpush2.msra.mxu0 0.0
    %1040 = vmatprep.mubr.f32.mxu0 0.0
    %1041 = vmatmul.mubr.f32.gmra.mxu0 %v974
    %v1042 = vpop.f32.mrf.mxu0
    %v1043 = vadd.f32 0.0, %v1042
    %v1044 = vpop.f32.mrf.mxu0
    %1045 = vdwg.mxu0
    %1046 = vrot.lane.b32.xlu0 %v130, 48
    %v1047 = vpop.permute.xlu0 %1046
    %v1050 = vsel %vm136, %v969, 0
    %1052 = vmatprep.subr.mxu0 0.0
    %1053 = vmatpush1.msra.mxu0 0.0
    %1054 = vmatprep.subr.mxu0 0.0
    %1055 = vmatpush1.msra.mxu0 0.0
    %1056 = vmatprep.subr.mxu0 0.0
    %1057 = vmatpush1.msra.mxu0 0.0
    %1058 = vmatprep.subr.mxu0 0.0
    %1059 = vmatpush1.msra.mxu0 0.0
    %1060 = vmatprep.subr.mxu0 0.0
    %1061 = vmatpush1.msra.mxu0 0.0
    %1062 = vmatprep.subr.mxu0 0.0
    %1063 = vmatpush1.msra.mxu0 0.0
    %1064 = vmatprep.subr.mxu0 0.0
    %1065 = vmatpush1.msra.mxu0 0.0
    %1066 = vmatprep.subr.mxu0 0.0
    %1067 = vmatpush1.msra.mxu0 0.0
    %1068 = vmatprep.subr.mxu0 0.0
    %1069 = vmatpush1.msra.mxu0 0.0
    %1070 = vmatprep.subr.mxu0 0.0
    %1071 = vmatpush1.msra.mxu0 0.0
    %1072 = vmatprep.subr.mxu0 0.0
    %1073 = vmatpush1.msra.mxu0 0.0
    %1074 = vmatprep.subr.mxu0 0.0
    %1075 = vmatpush1.msra.mxu0 0.0
    %1076 = vmatprep.subr.mxu0 0.0
    %1077 = vmatpush1.msra.mxu0 0.0
    %1078 = vmatprep.subr.mxu0 0.0
    %1079 = vmatpush1.msra.mxu0 0.0
    %1080 = vmatprep.subr.mxu0 0.0
    %1081 = vmatpush1.msra.mxu0 0.0
    %1082 = vmatprep.subr.mxu0 0.0
    %1083 = vmatpush1.msra.mxu0 %v1047
    %1084 = vmatprep.subr.mxu0 0.0
    %1085 = vmatpush2.msra.mxu0 0.0
    %1086 = vmatprep.subr.mxu0 0.0
    %1087 = vmatpush2.msra.mxu0 0.0
    %1088 = vmatprep.subr.mxu0 0.0
    %1089 = vmatpush2.msra.mxu0 0.0
    %1090 = vmatprep.subr.mxu0 0.0
    %1091 = vmatpush2.msra.mxu0 0.0
    %1092 = vmatprep.subr.mxu0 0.0
    %1093 = vmatpush2.msra.mxu0 0.0
    %1094 = vmatprep.subr.mxu0 0.0
    %1095 = vmatpush2.msra.mxu0 0.0
    %1096 = vmatprep.subr.mxu0 0.0
    %1097 = vmatpush2.msra.mxu0 0.0
    %1098 = vmatprep.subr.mxu0 0.0
    %1099 = vmatpush2.msra.mxu0 0.0
    %1100 = vmatprep.subr.mxu0 0.0
    %1101 = vmatpush2.msra.mxu0 0.0
    %1102 = vmatprep.subr.mxu0 0.0
    %1103 = vmatpush2.msra.mxu0 0.0
    %1104 = vmatprep.subr.mxu0 0.0
    %1105 = vmatpush2.msra.mxu0 0.0
    %1106 = vmatprep.subr.mxu0 0.0
    %1107 = vmatpush2.msra.mxu0 0.0
    %1108 = vmatprep.subr.mxu0 0.0
    %1109 = vmatpush2.msra.mxu0 0.0
    %1110 = vmatprep.subr.mxu0 0.0
    %1111 = vmatpush2.msra.mxu0 0.0
    %1112 = vmatprep.subr.mxu0 0.0
    %1113 = vmatpush2.msra.mxu0 0.0
    %1114 = vmatprep.subr.mxu0 0.0
    %1115 = vmatpush2.msra.mxu0 0.0
    %1116 = vmatprep.mubr.f32.mxu0 0.0
    %1117 = vmatmul.mubr.f32.gmra.mxu0 %v1050
    %v1118 = vpop.f32.mrf.mxu0
    %v1119 = vadd.f32 0.0, %v1118
    %v1120 = vpop.f32.mrf.mxu0
    %1121 = vdwg.mxu0
    %1122 = vrot.lane.b32.xlu0 %v125, 104
    %v1123 = vpop.permute.xlu0 %1122
    %1124 = vrot.lane.b32.xlu0 %v125, 72
    %v1125 = vpop.permute.xlu0 %1124
    %v1126 = vsel %vm136, %v1123, 0
    %v1128 = vsel %vm136, %v1125, 0
    %1130 = vmatprep.subr.mxu0 0.0
    %1131 = vmatpush1.xpose.msra.mxu0 0.0
    %1132 = vmatprep.subr.mxu0 0.0
    %1133 = vmatpush1.xpose.msra.mxu0 0.0
    %1134 = vmatprep.subr.mxu0 0.0
    %1135 = vmatpush1.xpose.msra.mxu0 0.0
    %1136 = vmatprep.subr.mxu0 0.0
    %1137 = vmatpush1.xpose.msra.mxu0 0.0
    %1138 = vmatprep.subr.mxu0 0.0
    %1139 = vmatpush1.xpose.msra.mxu0 0.0
    %1140 = vmatprep.subr.mxu0 0.0
    %1141 = vmatpush1.xpose.msra.mxu0 0.0
    %1142 = vmatprep.subr.mxu0 0.0
    %1143 = vmatpush1.xpose.msra.mxu0 0.0
    %1144 = vmatprep.subr.mxu0 0.0
    %1145 = vmatpush1.xpose.msra.mxu0 0.0
    %1146 = vmatprep.subr.mxu0 0.0
    %1147 = vmatpush1.xpose.msra.mxu0 0.0
    %1148 = vmatprep.subr.mxu0 0.0
    %1149 = vmatpush1.xpose.msra.mxu0 0.0
    %1150 = vmatprep.subr.mxu0 0.0
    %1151 = vmatpush1.xpose.msra.mxu0 0.0
    %1152 = vmatprep.subr.mxu0 0.0
    %1153 = vmatpush1.xpose.msra.mxu0 0.0
    %1154 = vmatprep.subr.mxu0 0.0
    %1155 = vmatpush1.xpose.msra.mxu0 0.0
    %1156 = vmatprep.subr.mxu0 0.0
    %1157 = vmatpush1.xpose.msra.mxu0 0.0
    %1158 = vmatprep.subr.mxu0 0.0
    %1159 = vmatpush1.xpose.msra.mxu0 0.0
    %1160 = vmatprep.subr.mxu0 0.0
    %1161 = vmatpush1.xpose.msra.mxu0 %v1128
    %1162 = vmatprep.subr.mxu0 0.0
    %1163 = vmatpush2.xpose.msra.mxu0 0.0
    %1164 = vmatprep.subr.mxu0 0.0
    %1165 = vmatpush2.xpose.msra.mxu0 0.0
    %1166 = vmatprep.subr.mxu0 0.0
    %1167 = vmatpush2.xpose.msra.mxu0 0.0
    %1168 = vmatprep.subr.mxu0 0.0
    %1169 = vmatpush2.xpose.msra.mxu0 0.0
    %1170 = vmatprep.subr.mxu0 0.0
    %1171 = vmatpush2.xpose.msra.mxu0 0.0
    %1172 = vmatprep.subr.mxu0 0.0
    %1173 = vmatpush2.xpose.msra.mxu0 0.0
    %1174 = vmatprep.subr.mxu0 0.0
    %1175 = vmatpush2.xpose.msra.mxu0 0.0
    %1176 = vmatprep.subr.mxu0 0.0
    %1177 = vmatpush2.xpose.msra.mxu0 0.0
    %1178 = vmatprep.subr.mxu0 0.0
    %1179 = vmatpush2.xpose.msra.mxu0 0.0
    %1180 = vmatprep.subr.mxu0 0.0
    %1181 = vmatpush2.xpose.msra.mxu0 0.0
    %1182 = vmatprep.subr.mxu0 0.0
    %1183 = vmatpush2.xpose.msra.mxu0 0.0
    %1184 = vmatprep.subr.mxu0 0.0
    %1185 = vmatpush2.xpose.msra.mxu0 0.0
    %1186 = vmatprep.subr.mxu0 0.0
    %1187 = vmatpush2.xpose.msra.mxu0 0.0
    %1188 = vmatprep.subr.mxu0 0.0
    %1189 = vmatpush2.xpose.msra.mxu0 0.0
    %1190 = vmatprep.subr.mxu0 0.0
    %1191 = vmatpush2.xpose.msra.mxu0 0.0
    %1192 = vmatprep.subr.mxu0 0.0
    %1193 = vmatpush2.xpose.msra.mxu0 0.0
    %1194 = vmatprep.mubr.f32.mxu0 0.0
    %1195 = vmatmul.mubr.f32.gmra.mxu0 %v1126
    %v1196 = vpop.f32.mrf.mxu0
    %v1197 = vadd.f32 0.0, %v1196
    %v1198 = vpop.f32.mrf.mxu0
    %1199 = vdwg.mxu0
    %1200 = vrot.lane.b32.xlu0 %v130, 104
    %v1201 = vpop.permute.xlu0 %1200
    %1202 = vrot.lane.b32.xlu0 %v130, 72
    %v1203 = vpop.permute.xlu0 %1202
    %v1204 = vsel %vm136, %v1201, 0
    %v1206 = vsel %vm136, %v1203, 0
    %1208 = vmatprep.subr.mxu0 0.0
    %1209 = vmatpush1.xpose.msra.mxu0 0.0
    %1210 = vmatprep.subr.mxu0 0.0
    %1211 = vmatpush1.xpose.msra.mxu0 0.0
    %1212 = vmatprep.subr.mxu0 0.0
    %1213 = vmatpush1.xpose.msra.mxu0 0.0
    %1214 = vmatprep.subr.mxu0 0.0
    %1215 = vmatpush1.xpose.msra.mxu0 0.0
    %1216 = vmatprep.subr.mxu0 0.0
    %1217 = vmatpush1.xpose.msra.mxu0 0.0
    %1218 = vmatprep.subr.mxu0 0.0
    %1219 = vmatpush1.xpose.msra.mxu0 0.0
    %1220 = vmatprep.subr.mxu0 0.0
    %1221 = vmatpush1.xpose.msra.mxu0 0.0
    %1222 = vmatprep.subr.mxu0 0.0
    %1223 = vmatpush1.xpose.msra.mxu0 0.0
    %1224 = vmatprep.subr.mxu0 0.0
    %1225 = vmatpush1.xpose.msra.mxu0 0.0
    %1226 = vmatprep.subr.mxu0 0.0
    %1227 = vmatpush1.xpose.msra.mxu0 0.0
    %1228 = vmatprep.subr.mxu0 0.0
    %1229 = vmatpush1.xpose.msra.mxu0 0.0
    %1230 = vmatprep.subr.mxu0 0.0
    %1231 = vmatpush1.xpose.msra.mxu0 0.0
    %1232 = vmatprep.subr.mxu0 0.0
    %1233 = vmatpush1.xpose.msra.mxu0 0.0
    %1234 = vmatprep.subr.mxu0 0.0
    %1235 = vmatpush1.xpose.msra.mxu0 0.0
    %1236 = vmatprep.subr.mxu0 0.0
    %1237 = vmatpush1.xpose.msra.mxu0 0.0
    %1238 = vmatprep.subr.mxu0 0.0
    %1239 = vmatpush1.xpose.msra.mxu0 %v1206
    %1240 = vmatprep.subr.mxu0 0.0
    %1241 = vmatpush2.xpose.msra.mxu0 0.0
    %1242 = vmatprep.subr.mxu0 0.0
    %1243 = vmatpush2.xpose.msra.mxu0 0.0
    %1244 = vmatprep.subr.mxu0 0.0
    %1245 = vmatpush2.xpose.msra.mxu0 0.0
    %1246 = vmatprep.subr.mxu0 0.0
    %1247 = vmatpush2.xpose.msra.mxu0 0.0
    %1248 = vmatprep.subr.mxu0 0.0
    %1249 = vmatpush2.xpose.msra.mxu0 0.0
    %1250 = vmatprep.subr.mxu0 0.0
    %1251 = vmatpush2.xpose.msra.mxu0 0.0
    %1252 = vmatprep.subr.mxu0 0.0
    %1253 = vmatpush2.xpose.msra.mxu0 0.0
    %1254 = vmatprep.subr.mxu0 0.0
    %1255 = vmatpush2.xpose.msra.mxu0 0.0
    %1256 = vmatprep.subr.mxu0 0.0
    %1257 = vmatpush2.xpose.msra.mxu0 0.0
    %1258 = vmatprep.subr.mxu0 0.0
    %1259 = vmatpush2.xpose.msra.mxu0 0.0
    %1260 = vmatprep.subr.mxu0 0.0
    %1261 = vmatpush2.xpose.msra.mxu0 0.0
    %1262 = vmatprep.subr.mxu0 0.0
    %1263 = vmatpush2.xpose.msra.mxu0 0.0
    %1264 = vmatprep.subr.mxu0 0.0
    %1265 = vmatpush2.xpose.msra.mxu0 0.0
    %1266 = vmatprep.subr.mxu0 0.0
    %1267 = vmatpush2.xpose.msra.mxu0 0.0
    %1268 = vmatprep.subr.mxu0 0.0
    %1269 = vmatpush2.xpose.msra.mxu0 0.0
    %1270 = vmatprep.subr.mxu0 0.0
    %1271 = vmatpush2.xpose.msra.mxu0 0.0
    %1272 = vmatprep.mubr.f32.mxu0 0.0
    %1273 = vmatmul.mubr.f32.gmra.mxu0 %v1204
    %v1274 = vpop.f32.mrf.mxu0
    %v1275 = vadd.f32 0.0, %v1274
    %v1276 = vpop.f32.mrf.mxu0
    %1277 = vdwg.mxu0
    %v1278 = vsel %vm136, %v1197, -inf
    %1279 = vmax.xlane.f32.xlu0 %v1278
    %v1280 = vpop.xlane.xlu0 %1279
    %v1281 = vsel %vm136, %v1275, -inf
    %1282 = vmax.xlane.f32.xlu0 %v1281
    %v1283 = vpop.xlane.xlu0 %1282
    %v1284 = vsub.f32 %v1197, %v1280
    %v1285 = vsub.f32 %v1275, %v1283
    %v1286 = vmul.f32 %v1284, 1.442695
    %v1287 = vpow.pop %v1286
    %v1288 = vmul.f32 %v1285, 1.442695
    %v1289 = vpow.pop %v1288
    %v1290 = vsel %vm136, %v1287, 0.0
    %1291 = vadd.xlane.f32.xlu0 %v1290
    %v1292 = vpop.xlane.xlu0 %1291
    %v1293 = vsel %vm136, %v1289, 0.0
    %1294 = vadd.xlane.f32.xlu0 %v1293
    %v1295 = vpop.xlane.xlu0 %1294
    %v1296 = vrcp.pop %v1292
    %v1297 = vmul.f32 %v1287, %v1296
    %v1298 = vrcp.pop %v1295
    %v1299 = vmul.f32 %v1289, %v1298
    %1300 = vrot.lane.b32.xlu0 %v125, 40
    %v1301 = vpop.permute.xlu0 %1300
    %v1304 = vsel %vm136, %v1297, 0
    %1306 = vmatprep.subr.mxu0 0.0
    %1307 = vmatpush1.msra.mxu0 0.0
    %1308 = vmatprep.subr.mxu0 0.0
    %1309 = vmatpush1.msra.mxu0 0.0
    %1310 = vmatprep.subr.mxu0 0.0
    %1311 = vmatpush1.msra.mxu0 0.0
    %1312 = vmatprep.subr.mxu0 0.0
    %1313 = vmatpush1.msra.mxu0 0.0
    %1314 = vmatprep.subr.mxu0 0.0
    %1315 = vmatpush1.msra.mxu0 0.0
    %1316 = vmatprep.subr.mxu0 0.0
    %1317 = vmatpush1.msra.mxu0 0.0
    %1318 = vmatprep.subr.mxu0 0.0
    %1319 = vmatpush1.msra.mxu0 0.0
    %1320 = vmatprep.subr.mxu0 0.0
    %1321 = vmatpush1.msra.mxu0 0.0
    %1322 = vmatprep.subr.mxu0 0.0
    %1323 = vmatpush1.msra.mxu0 0.0
    %1324 = vmatprep.subr.mxu0 0.0
    %1325 = vmatpush1.msra.mxu0 0.0
    %1326 = vmatprep.subr.mxu0 0.0
    %1327 = vmatpush1.msra.mxu0 0.0
    %1328 = vmatprep.subr.mxu0 0.0
    %1329 = vmatpush1.msra.mxu0 0.0
    %1330 = vmatprep.subr.mxu0 0.0
    %1331 = vmatpush1.msra.mxu0 0.0
    %1332 = vmatprep.subr.mxu0 0.0
    %1333 = vmatpush1.msra.mxu0 0.0
    %1334 = vmatprep.subr.mxu0 0.0
    %1335 = vmatpush1.msra.mxu0 0.0
    %1336 = vmatprep.subr.mxu0 0.0
    %1337 = vmatpush1.msra.mxu0 %v1301
    %1338 = vmatprep.subr.mxu0 0.0
    %1339 = vmatpush2.msra.mxu0 0.0
    %1340 = vmatprep.subr.mxu0 0.0
    %1341 = vmatpush2.msra.mxu0 0.0
    %1342 = vmatprep.subr.mxu0 0.0
    %1343 = vmatpush2.msra.mxu0 0.0
    %1344 = vmatprep.subr.mxu0 0.0
    %1345 = vmatpush2.msra.mxu0 0.0
    %1346 = vmatprep.subr.mxu0 0.0
    %1347 = vmatpush2.msra.mxu0 0.0
    %1348 = vmatprep.subr.mxu0 0.0
    %1349 = vmatpush2.msra.mxu0 0.0
    %1350 = vmatprep.subr.mxu0 0.0
    %1351 = vmatpush2.msra.mxu0 0.0
    %1352 = vmatprep.subr.mxu0 0.0
    %1353 = vmatpush2.msra.mxu0 0.0
    %1354 = vmatprep.subr.mxu0 0.0
    %1355 = vmatpush2.msra.mxu0 0.0
    %1356 = vmatprep.subr.mxu0 0.0
    %1357 = vmatpush2.msra.mxu0 0.0
    %1358 = vmatprep.subr.mxu0 0.0
    %1359 = vmatpush2.msra.mxu0 0.0
    %1360 = vmatprep.subr.mxu0 0.0
    %1361 = vmatpush2.msra.mxu0 0.0
    %1362 = vmatprep.subr.mxu0 0.0
    %1363 = vmatpush2.msra.mxu0 0.0
    %1364 = vmatprep.subr.mxu0 0.0
    %1365 = vmatpush2.msra.mxu0 0.0
    %1366 = vmatprep.subr.mxu0 0.0
    %1367 = vmatpush2.msra.mxu0 0.0
    %1368 = vmatprep.subr.mxu0 0.0
    %1369 = vmatpush2.msra.mxu0 0.0
    %1370 = vmatprep.mubr.f32.mxu0 0.0
    %1371 = vmatmul.mubr.f32.gmra.mxu0 %v1304
    %v1372 = vpop.f32.mrf.mxu0
    %v1373 = vadd.f32 0.0, %v1372
    %v1374 = vpop.f32.mrf.mxu0
    %1375 = vdwg.mxu0
    %1376 = vrot.lane.b32.xlu0 %v130, 40
    %v1377 = vpop.permute.xlu0 %1376
    %v1380 = vsel %vm136, %v1299, 0
    %1382 = vmatprep.subr.mxu0 0.0
    %1383 = vmatpush1.msra.mxu0 0.0
    %1384 = vmatprep.subr.mxu0 0.0
    %1385 = vmatpush1.msra.mxu0 0.0
    %1386 = vmatprep.subr.mxu0 0.0
    %1387 = vmatpush1.msra.mxu0 0.0
    %1388 = vmatprep.subr.mxu0 0.0
    %1389 = vmatpush1.msra.mxu0 0.0
    %1390 = vmatprep.subr.mxu0 0.0
    %1391 = vmatpush1.msra.mxu0 0.0
    %1392 = vmatprep.subr.mxu0 0.0
    %1393 = vmatpush1.msra.mxu0 0.0
    %1394 = vmatprep.subr.mxu0 0.0
    %1395 = vmatpush1.msra.mxu0 0.0
    %1396 = vmatprep.subr.mxu0 0.0
    %1397 = vmatpush1.msra.mxu0 0.0
    %1398 = vmatprep.subr.mxu0 0.0
    %1399 = vmatpush1.msra.mxu0 0.0
    %1400 = vmatprep.subr.mxu0 0.0
    %1401 = vmatpush1.msra.mxu0 0.0
    %1402 = vmatprep.subr.mxu0 0.0
    %1403 = vmatpush1.msra.mxu0 0.0
    %1404 = vmatprep.subr.mxu0 0.0
    %1405 = vmatpush1.msra.mxu0 0.0
    %1406 = vmatprep.subr.mxu0 0.0
    %1407 = vmatpush1.msra.mxu0 0.0
    %1408 = vmatprep.subr.mxu0 0.0
    %1409 = vmatpush1.msra.mxu0 0.0
    %1410 = vmatprep.subr.mxu0 0.0
    %1411 = vmatpush1.msra.mxu0 0.0
    %1412 = vmatprep.subr.mxu0 0.0
    %1413 = vmatpush1.msra.mxu0 %v1377
    %1414 = vmatprep.subr.mxu0 0.0
    %1415 = vmatpush2.msra.mxu0 0.0
    %1416 = vmatprep.subr.mxu0 0.0
    %1417 = vmatpush2.msra.mxu0 0.0
    %1418 = vmatprep.subr.mxu0 0.0
    %1419 = vmatpush2.msra.mxu0 0.0
    %1420 = vmatprep.subr.mxu0 0.0
    %1421 = vmatpush2.msra.mxu0 0.0
    %1422 = vmatprep.subr.mxu0 0.0
    %1423 = vmatpush2.msra.mxu0 0.0
    %1424 = vmatprep.subr.mxu0 0.0
    %1425 = vmatpush2.msra.mxu0 0.0
    %1426 = vmatprep.subr.mxu0 0.0
    %1427 = vmatpush2.msra.mxu0 0.0
    %1428 = vmatprep.subr.mxu0 0.0
    %1429 = vmatpush2.msra.mxu0 0.0
    %1430 = vmatprep.subr.mxu0 0.0
    %1431 = vmatpush2.msra.mxu0 0.0
    %1432 = vmatprep.subr.mxu0 0.0
    %1433 = vmatpush2.msra.mxu0 0.0
    %1434 = vmatprep.subr.mxu0 0.0
    %1435 = vmatpush2.msra.mxu0 0.0
    %1436 = vmatprep.subr.mxu0 0.0
    %1437 = vmatpush2.msra.mxu0 0.0
    %1438 = vmatprep.subr.mxu0 0.0
    %1439 = vmatpush2.msra.mxu0 0.0
    %1440 = vmatprep.subr.mxu0 0.0
    %1441 = vmatpush2.msra.mxu0 0.0
    %1442 = vmatprep.subr.mxu0 0.0
    %1443 = vmatpush2.msra.mxu0 0.0
    %1444 = vmatprep.subr.mxu0 0.0
    %1445 = vmatpush2.msra.mxu0 0.0
    %1446 = vmatprep.mubr.f32.mxu0 0.0
    %1447 = vmatmul.mubr.f32.gmra.mxu0 %v1380
    %v1448 = vpop.f32.mrf.mxu0
    %v1449 = vadd.f32 0.0, %v1448
    %v1450 = vpop.f32.mrf.mxu0
    %1451 = vdwg.mxu0
    %1454 = vrot.lane.b32.xlu0 %v713, 8
    %v1455 = vpop.permute.xlu0 %1454
    %1456 = vrot.lane.b32.xlu0 %v789, 8
    %v1457 = vpop.permute.xlu0 %1456
    %1462 = vrot.lane.b32.xlu0 %v1043, 16
    %v1463 = vpop.permute.xlu0 %1462
    %1464 = vrot.lane.b32.xlu0 %v1119, 16
    %v1465 = vpop.permute.xlu0 %1464
    %1470 = vrot.lane.b32.xlu0 %v1373, 24
    %v1471 = vpop.permute.xlu0 %1470
    %1472 = vrot.lane.b32.xlu0 %v1449, 24
    %v1473 = vpop.permute.xlu0 %1472
    %v1476 = vsel %vm136, %v383, %v1455
    %v1477 = vsel %vm136, %v459, %v1457
    %vm1478 = vcmask 130048
    %v1479 = vsel %vm1478, %v1476, %v1463
    %v1480 = vsel %vm1478, %v1477, %v1465
    %vm1481 = vcmask 195584
    %v1482 = vsel %vm1481, %v1479, %v1471
    %v1483 = vsel %vm1481, %v1480, %v1473
    %v1484 = vld [vmem:[#allocation5] sm:$0xff]
    %v1485 = vld [vmem:[#allocation5 + $0x8] sm:$0xff]
    %v1486 = vld [vmem:[#allocation5 + $0x10] sm:$0xff]
    %v1487 = vld [vmem:[#allocation5 + $0x18] sm:$0xff]
    %v1488 = vld [vmem:[#allocation5 + $0x60] sm:$0x1]
    %v1489 = vlaneseq
    %v1490 = vshrl.u32 %v1489, 7
    %v1491 = vsub.s32 0, %v1490
    %v1492 = vrot.slane %v1488, %v1491
    %1497 = vrot.lane.b32.xlu0 %v1484, 32
    %v1498 = vpop.permute.xlu0 %1497
    %1499 = vrot.lane.b32.xlu0 %v1485, 32
    %v1500 = vpop.permute.xlu0 %1499
    %1501 = vrot.lane.b32.xlu0 %v1486, 32
    %v1502 = vpop.permute.xlu0 %1501
    %1503 = vrot.lane.b32.xlu0 %v1487, 32
    %v1504 = vpop.permute.xlu0 %1503
    %1510 = vrot.lane.b32.xlu0 %v1492, 32
    %v1511 = vpop.permute.xlu0 %1510
    %v1514 = vsel %vm51, %v1482, 0
    %v1517 = vsel %vm51, %v1483, 0
    %1519 = vmatprep.subr.mxu0 0.0
    %1520 = vmatpush1.msra.mxu0 0.0
    %1521 = vmatprep.subr.mxu0 0.0
    %1522 = vmatpush1.msra.mxu0 0.0
    %1523 = vmatprep.subr.mxu0 0.0
    %1524 = vmatpush1.msra.mxu0 0.0
    %1525 = vmatprep.subr.mxu0 0.0
    %1526 = vmatpush1.msra.mxu0 0.0
    %1527 = vmatprep.subr.mxu0 0.0
    %1528 = vmatpush1.msra.mxu0 0.0
    %1529 = vmatprep.subr.mxu0 0.0
    %1530 = vmatpush1.msra.mxu0 0.0
    %1531 = vmatprep.subr.mxu0 0.0
    %1532 = vmatpush1.msra.mxu0 0.0
    %1533 = vmatprep.subr.mxu0 0.0
    %1534 = vmatpush1.msra.mxu0 0.0
    %1535 = vmatprep.subr.mxu0 0.0
    %1536 = vmatpush1.msra.mxu0 0.0
    %1537 = vmatprep.subr.mxu0 0.0
    %1538 = vmatpush1.msra.mxu0 0.0
    %1539 = vmatprep.subr.mxu0 0.0
    %1540 = vmatpush1.msra.mxu0 0.0
    %1541 = vmatprep.subr.mxu0 0.0
    %1542 = vmatpush1.msra.mxu0 0.0
    %1543 = vmatprep.subr.mxu0 0.0
    %1544 = vmatpush1.msra.mxu0 %v1504
    %1545 = vmatprep.subr.mxu0 0.0
    %1546 = vmatpush1.msra.mxu0 %v1502
    %1547 = vmatprep.subr.mxu0 0.0
    %1548 = vmatpush1.msra.mxu0 %v1500
    %1549 = vmatprep.subr.mxu0 0.0
    %1550 = vmatpush1.msra.mxu0 %v1498
    %1551 = vmatprep.subr.mxu0 0.0
    %1552 = vmatpush2.msra.mxu0 0.0
    %1553 = vmatprep.subr.mxu0 0.0
    %1554 = vmatpush2.msra.mxu0 0.0
    %1555 = vmatprep.subr.mxu0 0.0
    %1556 = vmatpush2.msra.mxu0 0.0
    %1557 = vmatprep.subr.mxu0 0.0
    %1558 = vmatpush2.msra.mxu0 0.0
    %1559 = vmatprep.subr.mxu0 0.0
    %1560 = vmatpush2.msra.mxu0 0.0
    %1561 = vmatprep.subr.mxu0 0.0
    %1562 = vmatpush2.msra.mxu0 0.0
    %1563 = vmatprep.subr.mxu0 0.0
    %1564 = vmatpush2.msra.mxu0 0.0
    %1565 = vmatprep.subr.mxu0 0.0
    %1566 = vmatpush2.msra.mxu0 0.0
    %1567 = vmatprep.subr.mxu0 0.0
    %1568 = vmatpush2.msra.mxu0 0.0
    %1569 = vmatprep.subr.mxu0 0.0
    %1570 = vmatpush2.msra.mxu0 0.0
    %1571 = vmatprep.subr.mxu0 0.0
    %1572 = vmatpush2.msra.mxu0 0.0
    %1573 = vmatprep.subr.mxu0 0.0
    %1574 = vmatpush2.msra.mxu0 0.0
    %1575 = vmatprep.subr.mxu0 0.0
    %1576 = vmatpush2.msra.mxu0 0.0
    %1577 = vmatprep.subr.mxu0 0.0
    %1578 = vmatpush2.msra.mxu0 0.0
    %1579 = vmatprep.subr.mxu0 0.0
    %1580 = vmatpush2.msra.mxu0 0.0
    %1581 = vmatprep.subr.mxu0 0.0
    %1582 = vmatpush2.msra.mxu0 0.0
    %1583 = vmatprep.mubr.f32.mxu0 0.0
    %1584 = vmatmul.mubr.f32.gmra.mxu0 %v1514
    %v1585 = vpop.f32.mrf.mxu0
    %v1586 = vadd.f32 %v1511, %v1585
    %v1587 = vpop.f32.mrf.mxu0
    %1588 = vmatprep.mubr.f32.mxu0 0.0
    %1589 = vmatmul.mubr.f32.gmra.mxu0 %v1517
    %v1590 = vpop.f32.mrf.mxu0
    %v1591 = vadd.f32 %v1511, %v1590
    %v1592 = vpop.f32.mrf.mxu0
    %1593 = vdwg.mxu0
    %v1594 = vadd.f32 %v1586, %v40
    %v1595 = vadd.f32 %v1591, %v41
    %v1596 = vld [vmem:[#allocation5 + $0x62] sm:$0x1]
    %v1597 = vsel %vm51, %v1594, 0.0
    %1598 = vadd.xlane.f32.xlu0 %v1597
    %v1599 = vpop.xlane.xlu0 %1598
    %v1600 = vsel %vm51, %v1595, 0.0
    %1601 = vadd.xlane.f32.xlu0 %v1600
    %v1602 = vpop.xlane.xlu0 %1601
    %v1603 = vrcp.pop 32.0
    %v1604 = vmul.f32 %v1599, %v1603
    %v1605 = vmul.f32 %v1602, %v1603
    %v1606 = vsub.f32 %v1594, %v1604
    %v1607 = vsub.f32 %v1595, %v1605
    %v1608 = vmul.f32 %v1606, %v1606
    %v1609 = vmul.f32 %v1607, %v1607
    %v1610 = vsel %vm51, %v1608, 0.0
    %1611 = vadd.xlane.f32.xlu0 %v1610
    %v1612 = vpop.xlane.xlu0 %1611
    %v1613 = vsel %vm51, %v1609, 0.0
    %1614 = vadd.xlane.f32.xlu0 %v1613
    %v1615 = vpop.xlane.xlu0 %1614
    %v1616 = vmul.f32 %v1612, %v1603
    %v1617 = vmul.f32 %v1615, %v1603
    %v1618 = vadd.f32 %v1616, 1e-12
    %v1619 = vadd.f32 %v1617, 1e-12
    %v1620 = vrsqrt.pop %v1618
    %v1621 = vrsqrt.pop %v1619
    %v1622 = vmul.f32 %v1606, %v1620
    %v1623 = vmul.f32 %v1607, %v1621
    %v1624 = vlaneseq
    %v1625 = vshrl.u32 %v1624, 7
    %v1626 = vsub.s32 0, %v1625
    %v1627 = vrot.slane %v1596, %v1626
    %v1628 = vmul.f32 %v1622, %v1627
    %v1629 = vmul.f32 %v1623, %v1627
    %1631 = vrot.lane.b32.xlu0 %v1627, 96
    %v1632 = vpop.permute.xlu0 %1631
    %v1634 = vadd.f32 %v1628, %v1632
    %v1635 = vadd.f32 %v1629, %v1632
    %v1636 = vld [vmem:[#allocation5 + $0x20] sm:$0xff]
    %v1637 = vld [vmem:[#allocation5 + $0x28] sm:$0xff]
    %v1638 = vld [vmem:[#allocation5 + $0x30] sm:$0xff]
    %v1639 = vld [vmem:[#allocation5 + $0x38] sm:$0xff]
    %v1640 = vld [vmem:[#allocation5 + $0x61] sm:$0x1]
    %v1641 = vlaneseq
    %v1642 = vshrl.u32 %v1641, 7
    %v1643 = vsub.s32 0, %v1642
    %v1644 = vrot.slane %v1640, %v1643
    %v1646 = vsel %vm51, %v1634, 0
    %v1649 = vsel %vm51, %v1635, 0
    %1651 = vmatprep.subr.mxu0 0.0
    %1652 = vmatpush1.msra.mxu0 0.0
    %1653 = vmatprep.subr.mxu0 0.0
    %1654 = vmatpush1.msra.mxu0 0.0
    %1655 = vmatprep.subr.mxu0 0.0
    %1656 = vmatpush1.msra.mxu0 0.0
    %1657 = vmatprep.subr.mxu0 0.0
    %1658 = vmatpush1.msra.mxu0 0.0
    %1659 = vmatprep.subr.mxu0 0.0
    %1660 = vmatpush1.msra.mxu0 0.0
    %1661 = vmatprep.subr.mxu0 0.0
    %1662 = vmatpush1.msra.mxu0 0.0
    %1663 = vmatprep.subr.mxu0 0.0
    %1664 = vmatpush1.msra.mxu0 0.0
    %1665 = vmatprep.subr.mxu0 0.0
    %1666 = vmatpush1.msra.mxu0 0.0
    %1667 = vmatprep.subr.mxu0 0.0
    %1668 = vmatpush1.msra.mxu0 0.0
    %1669 = vmatprep.subr.mxu0 0.0
    %1670 = vmatpush1.msra.mxu0 0.0
    %1671 = vmatprep.subr.mxu0 0.0
    %1672 = vmatpush1.msra.mxu0 0.0
    %1673 = vmatprep.subr.mxu0 0.0
    %1674 = vmatpush1.msra.mxu0 0.0
    %1675 = vmatprep.subr.mxu0 0.0
    %1676 = vmatpush1.msra.mxu0 %v1639
    %1677 = vmatprep.subr.mxu0 0.0
    %1678 = vmatpush1.msra.mxu0 %v1638
    %1679 = vmatprep.subr.mxu0 0.0
    %1680 = vmatpush1.msra.mxu0 %v1637
    %1681 = vmatprep.subr.mxu0 0.0
    %1682 = vmatpush1.msra.mxu0 %v1636
    %1683 = vmatprep.subr.mxu0 0.0
    %1684 = vmatpush2.msra.mxu0 0.0
    %1685 = vmatprep.subr.mxu0 0.0
    %1686 = vmatpush2.msra.mxu0 0.0
    %1687 = vmatprep.subr.mxu0 0.0
    %1688 = vmatpush2.msra.mxu0 0.0
    %1689 = vmatprep.subr.mxu0 0.0
    %1690 = vmatpush2.msra.mxu0 0.0
    %1691 = vmatprep.subr.mxu0 0.0
    %1692 = vmatpush2.msra.mxu0 0.0
    %1693 = vmatprep.subr.mxu0 0.0
    %1694 = vmatpush2.msra.mxu0 0.0
    %1695 = vmatprep.subr.mxu0 0.0
    %1696 = vmatpush2.msra.mxu0 0.0
    %1697 = vmatprep.subr.mxu0 0.0
    %1698 = vmatpush2.msra.mxu0 0.0
    %1699 = vmatprep.subr.mxu0 0.0
    %1700 = vmatpush2.msra.mxu0 0.0
    %1701 = vmatprep.subr.mxu0 0.0
    %1702 = vmatpush2.msra.mxu0 0.0
    %1703 = vmatprep.subr.mxu0 0.0
    %1704 = vmatpush2.msra.mxu0 0.0
    %1705 = vmatprep.subr.mxu0 0.0
    %1706 = vmatpush2.msra.mxu0 0.0
    %1707 = vmatprep.subr.mxu0 0.0
    %1708 = vmatpush2.msra.mxu0 0.0
    %1709 = vmatprep.subr.mxu0 0.0
    %1710 = vmatpush2.msra.mxu0 0.0
    %1711 = vmatprep.subr.mxu0 0.0
    %1712 = vmatpush2.msra.mxu0 0.0
    %1713 = vmatprep.subr.mxu0 0.0
    %1714 = vmatpush2.msra.mxu0 0.0
    %1715 = vmatprep.mubr.f32.mxu0 0.0
    %1716 = vmatmul.mubr.f32.gmra.mxu0 %v1646
    %v1717 = vpop.f32.mrf.mxu0
    %v1718 = vadd.f32 %v1644, %v1717
    %v1719 = vpop.f32.mrf.mxu0
    %1720 = vmatprep.mubr.f32.mxu0 0.0
    %1721 = vmatmul.mubr.f32.gmra.mxu0 %v1649
    %v1722 = vpop.f32.mrf.mxu0
    %v1723 = vadd.f32 %v1644, %v1722
    %v1724 = vpop.f32.mrf.mxu0
    %1725 = vdwg.mxu0
    %v1726 = vmax.f32 %v1718, 0.0
    %v1727 = vmax.f32 %v1723, 0.0
    %v1728 = vld [vmem:[#allocation5 + $0x20] sm:$0xff]
    %v1729 = vld [vmem:[#allocation5 + $0x28] sm:$0xff]
    %v1730 = vld [vmem:[#allocation5 + $0x30] sm:$0xff]
    %v1731 = vld [vmem:[#allocation5 + $0x38] sm:$0xff]
    %v1732 = vld [vmem:[#allocation5 + $0x40] sm:$0xff]
    %v1733 = vld [vmem:[#allocation5 + $0x48] sm:$0xff]
    %v1734 = vld [vmem:[#allocation5 + $0x50] sm:$0xff]
    %v1735 = vld [vmem:[#allocation5 + $0x58] sm:$0xff]
    %1744 = vrot.lane.b32.xlu0 %v1728, 64
    %v1745 = vpop.permute.xlu0 %1744
    %1746 = vrot.lane.b32.xlu0 %v1729, 64
    %v1747 = vpop.permute.xlu0 %1746
    %1748 = vrot.lane.b32.xlu0 %v1730, 64
    %v1749 = vpop.permute.xlu0 %1748
    %1750 = vrot.lane.b32.xlu0 %v1731, 64
    %v1751 = vpop.permute.xlu0 %1750
    %1752 = vrot.lane.b32.xlu0 %v1732, 64
    %v1753 = vpop.permute.xlu0 %1752
    %1754 = vrot.lane.b32.xlu0 %v1733, 64
    %v1755 = vpop.permute.xlu0 %1754
    %1756 = vrot.lane.b32.xlu0 %v1734, 64
    %v1757 = vpop.permute.xlu0 %1756
    %1758 = vrot.lane.b32.xlu0 %v1735, 64
    %v1759 = vpop.permute.xlu0 %1758
    %1769 = vrot.lane.b32.xlu0 %v1644, 64
    %v1770 = vpop.permute.xlu0 %1769
    %vm1772 = vcmask 523264
    %v1774 = vsel %vm1772, %v1726, 0
    %v1777 = vsel %vm1772, %v1727, 0
    %1779 = vmatprep.subr.mxu0 0.0
    %1780 = vmatpush1.msra.mxu0 0.0
    %1781 = vmatprep.subr.mxu0 0.0
    %1782 = vmatpush1.msra.mxu0 0.0
    %1783 = vmatprep.subr.mxu0 0.0
    %1784 = vmatpush1.msra.mxu0 0.0
    %1785 = vmatprep.subr.mxu0 0.0
    %1786 = vmatpush1.msra.mxu0 0.0
    %1787 = vmatprep.subr.mxu0 0.0
    %1788 = vmatpush1.msra.mxu0 0.0
    %1789 = vmatprep.subr.mxu0 0.0
    %1790 = vmatpush1.msra.mxu0 0.0
    %1791 = vmatprep.subr.mxu0 0.0
    %1792 = vmatpush1.msra.mxu0 0.0
    %1793 = vmatprep.subr.mxu0 0.0
    %1794 = vmatpush1.msra.mxu0 0.0
    %1795 = vmatprep.subr.mxu0 0.0
    %1796 = vmatpush1.msra.mxu0 %v1759
    %1797 = vmatprep.subr.mxu0 0.0
    %1798 = vmatpush1.msra.mxu0 %v1757
    %1799 = vmatprep.subr.mxu0 0.0
    %1800 = vmatpush1.msra.mxu0 %v1755
    %1801 = vmatprep.subr.mxu0 0.0
    %1802 = vmatpush1.msra.mxu0 %v1753
    %1803 = vmatprep.subr.mxu0 0.0
    %1804 = vmatpush1.msra.mxu0 %v1751
    %1805 = vmatprep.subr.mxu0 0.0
    %1806 = vmatpush1.msra.mxu0 %v1749
    %1807 = vmatprep.subr.mxu0 0.0
    %1808 = vmatpush1.msra.mxu0 %v1747
    %1809 = vmatprep.subr.mxu0 0.0
    %1810 = vmatpush1.msra.mxu0 %v1745
    %1811 = vmatprep.subr.mxu0 0.0
    %1812 = vmatpush2.msra.mxu0 0.0
    %1813 = vmatprep.subr.mxu0 0.0
    %1814 = vmatpush2.msra.mxu0 0.0
    %1815 = vmatprep.subr.mxu0 0.0
    %1816 = vmatpush2.msra.mxu0 0.0
    %1817 = vmatprep.subr.mxu0 0.0
    %1818 = vmatpush2.msra.mxu0 0.0
    %1819 = vmatprep.subr.mxu0 0.0
    %1820 = vmatpush2.msra.mxu0 0.0
    %1821 = vmatprep.subr.mxu0 0.0
    %1822 = vmatpush2.msra.mxu0 0.0
    %1823 = vmatprep.subr.mxu0 0.0
    %1824 = vmatpush2.msra.mxu0 0.0
    %1825 = vmatprep.subr.mxu0 0.0
    %1826 = vmatpush2.msra.mxu0 0.0
    %1827 = vmatprep.subr.mxu0 0.0
    %1828 = vmatpush2.msra.mxu0 0.0
    %1829 = vmatprep.subr.mxu0 0.0
    %1830 = vmatpush2.msra.mxu0 0.0
    %1831 = vmatprep.subr.mxu0 0.0
    %1832 = vmatpush2.msra.mxu0 0.0
    %1833 = vmatprep.subr.mxu0 0.0
    %1834 = vmatpush2.msra.mxu0 0.0
    %1835 = vmatprep.subr.mxu0 0.0
    %1836 = vmatpush2.msra.mxu0 0.0
    %1837 = vmatprep.subr.mxu0 0.0
    %1838 = vmatpush2.msra.mxu0 0.0
    %1839 = vmatprep.subr.mxu0 0.0
    %1840 = vmatpush2.msra.mxu0 0.0
    %1841 = vmatprep.subr.mxu0 0.0
    %1842 = vmatpush2.msra.mxu0 0.0
    %1843 = vmatprep.mubr.f32.mxu0 0.0
    %1844 = vmatmul.mubr.f32.gmra.mxu0 %v1774
    %v1845 = vpop.f32.mrf.mxu0
    %v1846 = vadd.f32 %v1770, %v1845
    %v1847 = vpop.f32.mrf.mxu0
    %1848 = vmatprep.mubr.f32.mxu0 0.0
    %1849 = vmatmul.mubr.f32.gmra.mxu0 %v1777
    %v1850 = vpop.f32.mrf.mxu0
    %v1851 = vadd.f32 %v1770, %v1850
    %v1852 = vpop.f32.mrf.mxu0
    %1853 = vdwg.mxu0
    %v1854 = vadd.f32 %v1846, %v1634
    %v1855 = vadd.f32 %v1851, %v1635
    %v1856 = vsel %vm51, %v1854, 0.0
    %1857 = vadd.xlane.f32.xlu0 %v1856
    %v1858 = vpop.xlane.xlu0 %1857
    %v1859 = vsel %vm51, %v1855, 0.0
    %1860 = vadd.xlane.f32.xlu0 %v1859
    %v1861 = vpop.xlane.xlu0 %1860
    %v1862 = vmul.f32 %v1858, %v1603
    %v1863 = vmul.f32 %v1861, %v1603
    %v1864 = vsub.f32 %v1854, %v1862
    %v1865 = vsub.f32 %v1855, %v1863
    %v1866 = vmul.f32 %v1864, %v1864
    %v1867 = vmul.f32 %v1865, %v1865
    %v1868 = vsel %vm51, %v1866, 0.0
    %1869 = vadd.xlane.f32.xlu0 %v1868
    %v1870 = vpop.xlane.xlu0 %1869
    %v1871 = vsel %vm51, %v1867, 0.0
    %1872 = vadd.xlane.f32.xlu0 %v1871
    %v1873 = vpop.xlane.xlu0 %1872
    %v1874 = vmul.f32 %v1870, %v1603
    %v1875 = vmul.f32 %v1873, %v1603
    %v1876 = vadd.f32 %v1874, 1e-12
    %v1877 = vadd.f32 %v1875, 1e-12
    %v1878 = vrsqrt.pop %v1876
    %v1879 = vrsqrt.pop %v1877
    %v1880 = vmul.f32 %v1864, %v1878
    %v1881 = vmul.f32 %v1865, %v1879
    %1882 = vrot.lane.b32.xlu0 %v1627, 64
    %v1883 = vpop.permute.xlu0 %1882
    %v1885 = vmul.f32 %v1880, %v1883
    %v1886 = vmul.f32 %v1881, %v1883
    %1887 = vrot.lane.b32.xlu0 %v1627, 32
    %v1888 = vpop.permute.xlu0 %1887
    %v1890 = vadd.f32 %v1885, %v1888
    %v1891 = vadd.f32 %v1886, %v1888
    %1892 = vst.msk [vmem:[#allocation7] sm:$0xff] %vm51, %v1890
    %1893 = vst.msk [vmem:[#allocation7 + $0x8] sm:$0xff] %vm51, %v1891
    // Predicated region
    $region18: #{tpu_custom_call.1} parent=1 // pred_check
      _
    $region19: #{tpu_custom_call.1} parent=1 // pred_check_branch
      %1895 = sbr.rel (0) target = $region21
    $region20: #{tpu_custom_call.1} parent=1 // pred_region
      %s1897 = ssub.s32 256, 256
      %1898 = vsyncadd [#allocation4], %s1897
      %s1899 = sshll.u32 [#allocation7], 4
      %s1900 = int_to_ptr.vmem [resolvable:$true] %s1899
      %1905 = dma.vmem_to_hbm [thread:$0]  %s1900, 256, %s2, [#allocation4], 128, 128, 8
    $region21: #{tpu_custom_call.1} parent=1 // pred_fallthru
      _
    // Predicated region
    $region22: #{tpu_custom_call.1} parent=1 // pred_check
      _
    $region23: #{tpu_custom_call.1} parent=1 // pred_check_branch
      %1907 = sbr.rel (0) target = $region25
    $region24: #{tpu_custom_call.1} parent=1 // pred_region
      %1908 = dma.done [#allocation4], 256
    $region25: #{tpu_custom_call.1} parent=1 // pred_fallthru
      _
    %1909 = vsyncpa [#allocation3], 1
    %1910 = vsyncpa [#allocation6], 1
    %1911 = vsyncpa [#allocation4], 1

</llo_original>
